<compile_context>
chip_gen: v6e
topology: v6e:2x2x1
jax: 0.10.0
libtpu: 0.0.40
codegen_flags: <defaults>
</compile_context>

<pallas_src>
import functools

import jax
import jax.numpy as jnp
from jax.experimental import pallas as pl
from jax.experimental.pallas import tpu as pltpu


# ----------------------------------------------------------------------------
# helpers
# ----------------------------------------------------------------------------
def _round_up(x, m):
    return ((x + m - 1) // m) * m


def _choose_row_tile(m_rows, kpad, cpad, emit_features):
    """Row tile over the per-item pixel axis.

    Multiple of 16 (bf16 sublane packing); sized so the double-buffered
    px/py (+ ox/oy) blocks plus the resident weight tile fit comfortably in
    the default scoped VMEM (~32 MiB) with headroom.
    """
    budget = 20 * 1024 * 1024
    fixed = 2 * kpad * cpad * 2 + 2 * cpad * 4         # weights (x2 buf) + bias
    per_row = 2 * 2 * kpad * 2                          # px + py, double-buffered bf16
    if emit_features:
        per_row += 2 * 2 * cpad * 2                     # ox + oy, double-buffered bf16
    tm_budget = max((budget - fixed) // max(per_row, 1), 16)
    tm = min(512, tm_budget, _round_up(max(m_rows, 1), 16))
    tm = max(16, (tm // 16) * 16)
    return tm


# ----------------------------------------------------------------------------
# Fused Pallas kernels: conv(x) & conv(y) + bias + LeakyReLU + per-item MSE
# ----------------------------------------------------------------------------
def _fused_layer_kernel(px_ref, py_ref, w_ref, b_ref,
                        ox_ref, oy_ref, mse_ref, *, inv_f):
    t = pl.program_id(1)

    @pl.when(t == 0)
    def _init():
        mse_ref[...] = jnp.zeros_like(mse_ref)

    w = w_ref[...]                                          # (Kpad, Cpad) bf16
    bias = b_ref[...]                                       # (1, Cpad)    f32
    ax = jnp.dot(px_ref[0], w, preferred_element_type=jnp.float32) + bias
    ay = jnp.dot(py_ref[0], w, preferred_element_type=jnp.float32) + bias
    ax = jnp.maximum(ax, 0.2 * ax)                          # LeakyReLU(0.2), f32
    ay = jnp.maximum(ay, 0.2 * ay)
    ox_ref[0] = ax.astype(ox_ref.dtype)                     # bf16 feature writeback
    oy_ref[0] = ay.astype(oy_ref.dtype)

    d = ax - ay                                             # f32 diff
    ssq = jnp.sum(jnp.sum(d * d, axis=1, keepdims=True), axis=0, keepdims=True)
    mse_ref[...] += ssq[None]                               # (1,1,1) VMEM-resident acc

    @pl.when(t == pl.num_programs(1) - 1)
    def _fin():
        mse_ref[...] = mse_ref[...] * inv_f


def _fused_layer_mse_only_kernel(px_ref, py_ref, w_ref, b_ref, mse_ref, *, inv_f):
    """Last layer: features are not needed downstream, only the MSE."""
    t = pl.program_id(1)

    @pl.when(t == 0)
    def _init():
        mse_ref[...] = jnp.zeros_like(mse_ref)

    w = w_ref[...]
    bias = b_ref[...]
    ax = jnp.dot(px_ref[0], w, preferred_element_type=jnp.float32) + bias
    ay = jnp.dot(py_ref[0], w, preferred_element_type=jnp.float32) + bias
    ax = jnp.maximum(ax, 0.2 * ax)
    ay = jnp.maximum(ay, 0.2 * ay)

    d = ax - ay
    ssq = jnp.sum(jnp.sum(d * d, axis=1, keepdims=True), axis=0, keepdims=True)
    mse_ref[...] += ssq[None]

    @pl.when(t == pl.num_programs(1) - 1)
    def _fin():
        mse_ref[...] = mse_ref[...] * inv_f


# ----------------------------------------------------------------------------
# Glue: NHWC im2col (pure layout, no FLOPs)
# ----------------------------------------------------------------------------
def im2col_nhwc(x_nhwc, k, stride, pad):
    """x: [N, H, W, C] -> patches [N, Ho*Wo, k*k*C] (patch dim order (kh,kw,c))."""
    N, H, W, C = x_nhwc.shape
    xp = jnp.pad(x_nhwc, ((0, 0), (pad, pad), (pad, pad), (0, 0)))
    Ho = (H + 2 * pad - k) // stride + 1
    Wo = (W + 2 * pad - k) // stride + 1
    cols = []
    for kh in range(k):
        for kw in range(k):
            cols.append(xp[:, kh:kh + stride * Ho:stride,
                           kw:kw + stride * Wo:stride, :])         # [N, Ho, Wo, C]
    col = jnp.concatenate(cols, axis=-1)                           # [N, Ho, Wo, k*k*C]
    return col.reshape(N, Ho * Wo, k * k * C), Ho, Wo


# ----------------------------------------------------------------------------
# One fused discriminator layer on (x, y) pair
# ----------------------------------------------------------------------------
def fused_conv_layer(fx, fy, w, b, *, k=4, stride=2, pad=1, emit_features=True):
    """fx, fy: [N, H, W, Cin] bf16 channels-last.  w: [Cout, Cin, k, k] f32."""
    N, H, W, Cin = fx.shape
    Cout = int(w.shape[0])

    px, Ho, Wo = im2col_nhwc(fx, k, stride, pad)                   # [N, Mrow, Kdim]
    py, _, _ = im2col_nhwc(fy, k, stride, pad)
    Mrow = Ho * Wo
    Kdim = k * k * Cin

    Kpad = _round_up(Kdim, 128)
    Cpad = _round_up(Cout, 128)
    TM = _choose_row_tile(Mrow, Kpad, Cpad, emit_features)
    Mpad = _round_up(Mrow, TM)
    T = Mpad // TM

    # Zero-padding: padded rows give identical activations for x and y,
    # padded channels give zero activations -> MSE is unaffected.
    px = jnp.pad(px, ((0, 0), (0, Mpad - Mrow), (0, Kpad - Kdim))).astype(jnp.bfloat16)
    py = jnp.pad(py, ((0, 0), (0, Mpad - Mrow), (0, Kpad - Kdim))).astype(jnp.bfloat16)
    w_mat = w.transpose(2, 3, 1, 0).reshape(Kdim, Cout)            # (kh,kw,cin) x cout
    w_mat = jnp.pad(w_mat, ((0, Kpad - Kdim), (0, Cpad - Cout))).astype(jnp.bfloat16)
    b_row = jnp.pad(b.reshape(1, Cout), ((0, 0), (0, Cpad - Cout))).astype(jnp.float32)

    inv_f = 1.0 / float(Cout * Mrow)                               # unpadded feature count

    in_specs = [
        pl.BlockSpec((1, TM, Kpad), lambda bi, ti: (bi, ti, 0)),
        pl.BlockSpec((1, TM, Kpad), lambda bi, ti: (bi, ti, 0)),
        pl.BlockSpec((Kpad, Cpad), lambda bi, ti: (0, 0)),         # resident weights
        pl.BlockSpec((1, Cpad), lambda bi, ti: (0, 0)),
    ]
    mse_shape = jax.ShapeDtypeStruct((N, 1, 1), jnp.float32)
    mse_spec = pl.BlockSpec((1, 1, 1), lambda bi, ti: (bi, 0, 0))

    flops = 2 * 2 * N * Mpad * Kpad * Cpad
    bytes_accessed = (2 * N * Mpad * Kpad * 2 + Kpad * Cpad * 2 + Cpad * 4
                      + (2 * N * Mpad * Cpad * 2 if emit_features else 0) + N * 4)
    cost = pl.CostEstimate(flops=flops, transcendentals=0,
                           bytes_accessed=bytes_accessed)
    cparams = pltpu.CompilerParams(
        dimension_semantics=("parallel", "arbitrary"))

    if emit_features:
        out_shape = (
            jax.ShapeDtypeStruct((N, Mpad, Cpad), jnp.bfloat16),
            jax.ShapeDtypeStruct((N, Mpad, Cpad), jnp.bfloat16),
            mse_shape,
        )
        out_specs = (
            pl.BlockSpec((1, TM, Cpad), lambda bi, ti: (bi, ti, 0)),
            pl.BlockSpec((1, TM, Cpad), lambda bi, ti: (bi, ti, 0)),
            mse_spec,
        )
        ox, oy, mse = pl.pallas_call(
            functools.partial(_fused_layer_kernel, inv_f=inv_f),
            out_shape=out_shape,
            grid=(N, T),
            in_specs=in_specs,
            out_specs=out_specs,
            compiler_params=cparams,
            cost_estimate=cost,
        )(px, py, w_mat, b_row)
        feat_x = ox[:, :Mrow, :Cout].reshape(N, Ho, Wo, Cout)
        feat_y = oy[:, :Mrow, :Cout].reshape(N, Ho, Wo, Cout)
        return feat_x, feat_y, mse[:, 0, 0]

    mse = pl.pallas_call(
        functools.partial(_fused_layer_mse_only_kernel, inv_f=inv_f),
        out_shape=mse_shape,
        grid=(N, T),
        in_specs=in_specs,
        out_specs=mse_spec,
        compiler_params=cparams,
        cost_estimate=cost,
    )(px, py, w_mat, b_row)
    return None, None, mse[:, 0, 0]


# ----------------------------------------------------------------------------
# Synthetic deterministic patch discriminator parameters
# ----------------------------------------------------------------------------
def make_discriminator_params(key, in_ch=4, widths=(8, 16, 32), k=4):
    """PatchGAN-style conv weights: [Cout, Cin, k, k] + bias [Cout]."""
    params = []
    cin = in_ch
    for cout in widths:
        key, wk = jax.random.split(key)
        fan_in = cin * k * k
        w = jax.random.normal(wk, (cout, cin, k, k), jnp.float32) * (2.0 / fan_in) ** 0.5
        b = jnp.zeros((cout,), jnp.float32)
        params.append((w, b))
        cin = cout
    return params


# ----------------------------------------------------------------------------
# DiscriminatorPerceptualLoss forward (avg_batch=True semantics)
# ----------------------------------------------------------------------------
@jax.jit
def discriminator_perceptual_loss(params, x, y):
    # module boundary is NCHW like PyTorch; one transpose to channels-last total
    fx = jnp.transpose(x, (0, 2, 3, 1)).astype(jnp.bfloat16)
    fy = jnp.transpose(y, (0, 2, 3, 1)).astype(jnp.bfloat16)
    N = x.shape[0]
    loss_per_item = jnp.zeros((N,), jnp.float32)
    n_layers = len(params)
    for li, (w, b) in enumerate(params):
        emit = li < n_layers - 1
        fx_next, fy_next, mse_b = fused_conv_layer(fx, fy, w, b, emit_features=emit)
        loss_per_item = loss_per_item + mse_b
        if emit:
            fx, fy = fx_next, fy_next
    # mean over batch of the tiny [N] vector (glue-level reduction)
    return jnp.mean(loss_per_item)


if __name__ == "__main__":
    key = jax.random.PRNGKey(0)
    kx, ky, kp = jax.random.split(key, 3)

    # small shapes consistent with [batch, channel, x, y] input format
    x = jax.random.normal(kx, (2, 4, 16, 16), jnp.float32)
    y = jax.random.normal(ky, (2, 4, 16, 16), jnp.float32)

    params = make_discriminator_params(kp, in_ch=4, widths=(8, 16, 32), k=4)

    loss = discriminator_perceptual_loss(params, x, y)
    jax.block_until_ready(loss)
    assert loss.shape == () and bool(jnp.isfinite(loss))
    print("KERNEL_OK")
</pallas_src>

<mosaic_0001>
module attributes {stable_mosaic.version = 11 : i64} {
  func.func @_fused_layer_kernel(%arg0: i32, %arg1: i32, %arg2: memref<1x64x128xbf16, #tpu.memory_space<vmem>>, %arg3: memref<1x64x128xbf16, #tpu.memory_space<vmem>>, %arg4: memref<128x128xbf16, #tpu.memory_space<vmem>>, %arg5: memref<1x128xf32, #tpu.memory_space<vmem>>, %arg6: memref<1x64x128xbf16, #tpu.memory_space<vmem>>, %arg7: memref<1x64x128xbf16, #tpu.memory_space<vmem>>, %arg8: memref<1x1x1xf32, #tpu.memory_space<vmem>>) attributes {dimension_semantics = [#tpu.dimension_semantics<parallel>, #tpu.dimension_semantics<arbitrary>], iteration_bounds = array<i64: 2, 1>, scalar_prefetch = 0 : i64, scratch_operands = 0 : i64, tpu.core_type = #tpu.core_type<tc>, window_params = [{transform_indices = @transform_0, window_bounds = array<i64: 1, 64, 128>}, {transform_indices = @transform_1, window_bounds = array<i64: 1, 64, 128>}, {pipeline_mode = #tpu.pipeline_mode<synchronous>, transform_indices = @transform_2, window_bounds = array<i64: 128, 128>}, {pipeline_mode = #tpu.pipeline_mode<synchronous>, transform_indices = @transform_3, window_bounds = array<i64: 1, 128>}, {transform_indices = @transform_4, window_bounds = array<i64: 1, 64, 128>}, {transform_indices = @transform_5, window_bounds = array<i64: 1, 64, 128>}, {transform_indices = @transform_6, window_bounds = array<i64: 1, 1, 1>}]} {
    %c0_i32 = arith.constant 0 : i32
    %0 = arith.cmpi eq, %arg1, %c0_i32 : i32
    %1 = arith.extui %0 : i1 to i32
    %c0_i32_0 = arith.constant 0 : i32
    %2 = arith.cmpi ne, %1, %c0_i32_0 : i32
    scf.if %2 {
      %cst_29 = arith.constant 0.000000e+00 : f32
      %42 = vector.broadcast %cst_29 : f32 to vector<1x1x1xf32>
      %c0_30 = arith.constant 0 : index
      %c0_31 = arith.constant 0 : index
      %c0_32 = arith.constant 0 : index
      %43 = vector.load %arg8[%c0_30, %c0_31, %c0_32] : memref<1x1x1xf32, #tpu.memory_space<vmem>>, vector<1x1x1xf32>
      tpu.vector_store %arg8[%c0_30, %c0_31, %c0_32], %42 {strides = array<i32>} : memref<1x1x1xf32, #tpu.memory_space<vmem>>, vector<1x1x1xf32>,
    } else {
    }
    %c0 = arith.constant 0 : index
    %c0_1 = arith.constant 0 : index
    %3 = vector.load %arg4[%c0, %c0_1] : memref<128x128xbf16, #tpu.memory_space<vmem>>, vector<128x128xbf16>
    %c0_2 = arith.constant 0 : index
    %c0_3 = arith.constant 0 : index
    %4 = vector.load %arg5[%c0_2, %c0_3] : memref<1x128xf32, #tpu.memory_space<vmem>>, vector<1x128xf32>
    %c0_4 = arith.constant 0 : index
    %c0_5 = arith.constant 0 : index
    %c0_6 = arith.constant 0 : index
    %5 = vector.load %arg2[%c0_4, %c0_5, %c0_6] : memref<1x64x128xbf16, #tpu.memory_space<vmem>>, vector<1x64x128xbf16>
    %6 = vector.shape_cast %5 : vector<1x64x128xbf16> to vector<64x128xbf16>
    %cst = arith.constant dense<0.000000e+00> : vector<64x128xf32>
    %7 = tpu.matmul %6, %3, %cst {dimension_numbers = #tpu.dot_dimension_numbers<[1], [0], [0], [1], [0, 0, 1, 1], [], []>} : vector<64x128xbf16>, vector<128x128xbf16>, vector<64x128xf32> -> vector<64x128xf32>
    %8 = vector.broadcast %4 : vector<1x128xf32> to vector<64x128xf32>
    %9 = arith.addf %7, %8 : vector<64x128xf32>
    %c0_7 = arith.constant 0 : index
    %c0_8 = arith.constant 0 : index
    %c0_9 = arith.constant 0 : index
    %10 = vector.load %arg3[%c0_7, %c0_8, %c0_9] : memref<1x64x128xbf16, #tpu.memory_space<vmem>>, vector<1x64x128xbf16>
    %11 = vector.shape_cast %10 : vector<1x64x128xbf16> to vector<64x128xbf16>
    %cst_10 = arith.constant dense<0.000000e+00> : vector<64x128xf32>
    %12 = tpu.matmul %11, %3, %cst_10 {dimension_numbers = #tpu.dot_dimension_numbers<[1], [0], [0], [1], [0, 0, 1, 1], [], []>} : vector<64x128xbf16>, vector<128x128xbf16>, vector<64x128xf32> -> vector<64x128xf32>
    %13 = vector.broadcast %4 : vector<1x128xf32> to vector<64x128xf32>
    %14 = arith.addf %12, %13 : vector<64x128xf32>
    %cst_11 = arith.constant 2.000000e-01 : f32
    %15 = vector.broadcast %cst_11 : f32 to vector<64x128xf32>
    %16 = arith.mulf %15, %9 : vector<64x128xf32>
    %17 = arith.maximumf %9, %16 : vector<64x128xf32>
    %cst_12 = arith.constant 2.000000e-01 : f32
    %18 = vector.broadcast %cst_12 : f32 to vector<64x128xf32>
    %19 = arith.mulf %18, %14 : vector<64x128xf32>
    %20 = arith.maximumf %14, %19 : vector<64x128xf32>
    %21 = arith.truncf %17 : vector<64x128xf32> to vector<64x128xbf16>
    %c0_13 = arith.constant 0 : index
    %c0_14 = arith.constant 0 : index
    %c0_15 = arith.constant 0 : index
    %22 = vector.load %arg6[%c0_13, %c0_14, %c0_15] : memref<1x64x128xbf16, #tpu.memory_space<vmem>>, vector<1x64x128xbf16>
    %23 = vector.shape_cast %22 : vector<1x64x128xbf16> to vector<64x128xbf16>
    %24 = vector.shape_cast %21 : vector<64x128xbf16> to vector<1x64x128xbf16>
    tpu.vector_store %arg6[%c0_13, %c0_14, %c0_15], %24 {strides = array<i32>} : memref<1x64x128xbf16, #tpu.memory_space<vmem>>, vector<1x64x128xbf16>,
    %25 = arith.truncf %20 : vector<64x128xf32> to vector<64x128xbf16>
    %c0_16 = arith.constant 0 : index
    %c0_17 = arith.constant 0 : index
    %c0_18 = arith.constant 0 : index
    %26 = vector.load %arg7[%c0_16, %c0_17, %c0_18] : memref<1x64x128xbf16, #tpu.memory_space<vmem>>, vector<1x64x128xbf16>
    %27 = vector.shape_cast %26 : vector<1x64x128xbf16> to vector<64x128xbf16>
    %28 = vector.shape_cast %25 : vector<64x128xbf16> to vector<1x64x128xbf16>
    tpu.vector_store %arg7[%c0_16, %c0_17, %c0_18], %28 {strides = array<i32>} : memref<1x64x128xbf16, #tpu.memory_space<vmem>>, vector<1x64x128xbf16>,
    %29 = arith.subf %17, %20 : vector<64x128xf32>
    %30 = arith.mulf %29, %29 : vector<64x128xf32>
    %cst_19 = arith.constant dense<0.000000e+00> : vector<64xf32>
    %31 = vector.multi_reduction <add>, %30, %cst_19 [1] : vector<64x128xf32> to vector<64xf32>
    %32 = vector.shape_cast %31 : vector<64xf32> to vector<64x1xf32>
    %cst_20 = arith.constant dense<0.000000e+00> : vector<1xf32>
    %33 = vector.multi_reduction <add>, %32, %cst_20 [0] : vector<64x1xf32> to vector<1xf32>
    %34 = vector.shape_cast %33 : vector<1xf32> to vector<1x1xf32>
    %c0_21 = arith.constant 0 : index
    %c0_22 = arith.constant 0 : index
    %c0_23 = arith.constant 0 : index
    %35 = vector.load %arg8[%c0_21, %c0_22, %c0_23] : memref<1x1x1xf32, #tpu.memory_space<vmem>>, vector<1x1x1xf32>
    %36 = vector.shape_cast %34 : vector<1x1xf32> to vector<1x1x1xf32>
    %37 = arith.addf %35, %36 : vector<1x1x1xf32>
    %c0_24 = arith.constant 0 : index
    %c0_25 = arith.constant 0 : index
    %c0_26 = arith.constant 0 : index
    %38 = vector.load %arg8[%c0_24, %c0_25, %c0_26] : memref<1x1x1xf32, #tpu.memory_space<vmem>>, vector<1x1x1xf32>
    tpu.vector_store %arg8[%c0_24, %c0_25, %c0_26], %37 {strides = array<i32>} : memref<1x1x1xf32, #tpu.memory_space<vmem>>, vector<1x1x1xf32>,
    %c0_i32_27 = arith.constant 0 : i32
    %39 = arith.cmpi eq, %arg1, %c0_i32_27 : i32
    %40 = arith.extui %39 : i1 to i32
    %c0_i32_28 = arith.constant 0 : i32
    %41 = arith.cmpi ne, %40, %c0_i32_28 : i32
    scf.if %41 {
      %c0_29 = arith.constant 0 : index
      %c0_30 = arith.constant 0 : index
      %c0_31 = arith.constant 0 : index
      %42 = vector.load %arg8[%c0_29, %c0_30, %c0_31] : memref<1x1x1xf32, #tpu.memory_space<vmem>>, vector<1x1x1xf32>
      %cst_32 = arith.constant 0.001953125 : f32
      %43 = vector.broadcast %cst_32 : f32 to vector<1x1x1xf32>
      %44 = arith.mulf %42, %43 : vector<1x1x1xf32>
      %c0_33 = arith.constant 0 : index
      %c0_34 = arith.constant 0 : index
      %c0_35 = arith.constant 0 : index
      %45 = vector.load %arg8[%c0_33, %c0_34, %c0_35] : memref<1x1x1xf32, #tpu.memory_space<vmem>>, vector<1x1x1xf32>
      tpu.vector_store %arg8[%c0_33, %c0_34, %c0_35], %44 {strides = array<i32>} : memref<1x1x1xf32, #tpu.memory_space<vmem>>, vector<1x1x1xf32>,
    } else {
    }
    return
  }
  func.func @transform_0(%arg0: i32, %arg1: i32) -> (i32, i32, i32) {
    %c0_i32 = arith.constant 0 : i32
    %c0_i32_0 = arith.constant 0 : i32
    return %arg0, %arg1, %c0_i32 : i32, i32, i32
  }
  func.func @transform_1(%arg0: i32, %arg1: i32) -> (i32, i32, i32) {
    %c0_i32 = arith.constant 0 : i32
    %c0_i32_0 = arith.constant 0 : i32
    return %arg0, %arg1, %c0_i32 : i32, i32, i32
  }
  func.func @transform_2(%arg0: i32, %arg1: i32) -> (i32, i32) {
    %c0_i32 = arith.constant 0 : i32
    %c0_i32_0 = arith.constant 0 : i32
    %c0_i32_1 = arith.constant 0 : i32
    return %c0_i32, %c0_i32_0 : i32, i32
  }
  func.func @transform_3(%arg0: i32, %arg1: i32) -> (i32, i32) {
    %c0_i32 = arith.constant 0 : i32
    %c0_i32_0 = arith.constant 0 : i32
    %c0_i32_1 = arith.constant 0 : i32
    return %c0_i32, %c0_i32_0 : i32, i32
  }
  func.func @transform_4(%arg0: i32, %arg1: i32) -> (i32, i32, i32) {
    %c0_i32 = arith.constant 0 : i32
    %c0_i32_0 = arith.constant 0 : i32
    return %arg0, %arg1, %c0_i32 : i32, i32, i32
  }
  func.func @transform_5(%arg0: i32, %arg1: i32) -> (i32, i32, i32) {
    %c0_i32 = arith.constant 0 : i32
    %c0_i32_0 = arith.constant 0 : i32
    return %arg0, %arg1, %c0_i32 : i32, i32, i32
  }
  func.func @transform_6(%arg0: i32, %arg1: i32) -> (i32, i32, i32) {
    %c0_i32 = arith.constant 0 : i32
    %c0_i32_0 = arith.constant 0 : i32
    %c0_i32_1 = arith.constant 0 : i32
    return %arg0, %c0_i32, %c0_i32_0 : i32, i32, i32
  }
}

module attributes {stable_mosaic.version = 11 : i64} {
  func.func @_fused_layer_kernel(%arg0: i32, %arg1: i32, %arg2: memref<1x16x128xbf16, #tpu.memory_space<vmem>>, %arg3: memref<1x16x128xbf16, #tpu.memory_space<vmem>>, %arg4: memref<128x128xbf16, #tpu.memory_space<vmem>>, %arg5: memref<1x128xf32, #tpu.memory_space<vmem>>, %arg6: memref<1x16x128xbf16, #tpu.memory_space<vmem>>, %arg7: memref<1x16x128xbf16, #tpu.memory_space<vmem>>, %arg8: memref<1x1x1xf32, #tpu.memory_space<vmem>>) attributes {dimension_semantics = [#tpu.dimension_semantics<parallel>, #tpu.dimension_semantics<arbitrary>], iteration_bounds = array<i64: 2, 1>, scalar_prefetch = 0 : i64, scratch_operands = 0 : i64, tpu.core_type = #tpu.core_type<tc>, window_params = [{transform_indices = @transform_0, window_bounds = array<i64: 1, 16, 128>}, {transform_indices = @transform_1, window_bounds = array<i64: 1, 16, 128>}, {pipeline_mode = #tpu.pipeline_mode<synchronous>, transform_indices = @transform_2, window_bounds = array<i64: 128, 128>}, {pipeline_mode = #tpu.pipeline_mode<synchronous>, transform_indices = @transform_3, window_bounds = array<i64: 1, 128>}, {transform_indices = @transform_4, window_bounds = array<i64: 1, 16, 128>}, {transform_indices = @transform_5, window_bounds = array<i64: 1, 16, 128>}, {transform_indices = @transform_6, window_bounds = array<i64: 1, 1, 1>}]} {
    %c0_i32 = arith.constant 0 : i32
    %0 = arith.cmpi eq, %arg1, %c0_i32 : i32
    %1 = arith.extui %0 : i1 to i32
    %c0_i32_0 = arith.constant 0 : i32
    %2 = arith.cmpi ne, %1, %c0_i32_0 : i32
    scf.if %2 {
      %cst_29 = arith.constant 0.000000e+00 : f32
      %42 = vector.broadcast %cst_29 : f32 to vector<1x1x1xf32>
      %c0_30 = arith.constant 0 : index
      %c0_31 = arith.constant 0 : index
      %c0_32 = arith.constant 0 : index
      %43 = vector.load %arg8[%c0_30, %c0_31, %c0_32] : memref<1x1x1xf32, #tpu.memory_space<vmem>>, vector<1x1x1xf32>
      tpu.vector_store %arg8[%c0_30, %c0_31, %c0_32], %42 {strides = array<i32>} : memref<1x1x1xf32, #tpu.memory_space<vmem>>, vector<1x1x1xf32>,
    } else {
    }
    %c0 = arith.constant 0 : index
    %c0_1 = arith.constant 0 : index
    %3 = vector.load %arg4[%c0, %c0_1] : memref<128x128xbf16, #tpu.memory_space<vmem>>, vector<128x128xbf16>
    %c0_2 = arith.constant 0 : index
    %c0_3 = arith.constant 0 : index
    %4 = vector.load %arg5[%c0_2, %c0_3] : memref<1x128xf32, #tpu.memory_space<vmem>>, vector<1x128xf32>
    %c0_4 = arith.constant 0 : index
    %c0_5 = arith.constant 0 : index
    %c0_6 = arith.constant 0 : index
    %5 = vector.load %arg2[%c0_4, %c0_5, %c0_6] : memref<1x16x128xbf16, #tpu.memory_space<vmem>>, vector<1x16x128xbf16>
    %6 = vector.shape_cast %5 : vector<1x16x128xbf16> to vector<16x128xbf16>
    %cst = arith.constant dense<0.000000e+00> : vector<16x128xf32>
    %7 = tpu.matmul %6, %3, %cst {dimension_numbers = #tpu.dot_dimension_numbers<[1], [0], [0], [1], [0, 0, 1, 1], [], []>} : vector<16x128xbf16>, vector<128x128xbf16>, vector<16x128xf32> -> vector<16x128xf32>
    %8 = vector.broadcast %4 : vector<1x128xf32> to vector<16x128xf32>
    %9 = arith.addf %7, %8 : vector<16x128xf32>
    %c0_7 = arith.constant 0 : index
    %c0_8 = arith.constant 0 : index
    %c0_9 = arith.constant 0 : index
    %10 = vector.load %arg3[%c0_7, %c0_8, %c0_9] : memref<1x16x128xbf16, #tpu.memory_space<vmem>>, vector<1x16x128xbf16>
    %11 = vector.shape_cast %10 : vector<1x16x128xbf16> to vector<16x128xbf16>
    %cst_10 = arith.constant dense<0.000000e+00> : vector<16x128xf32>
    %12 = tpu.matmul %11, %3, %cst_10 {dimension_numbers = #tpu.dot_dimension_numbers<[1], [0], [0], [1], [0, 0, 1, 1], [], []>} : vector<16x128xbf16>, vector<128x128xbf16>, vector<16x128xf32> -> vector<16x128xf32>
    %13 = vector.broadcast %4 : vector<1x128xf32> to vector<16x128xf32>
    %14 = arith.addf %12, %13 : vector<16x128xf32>
    %cst_11 = arith.constant 2.000000e-01 : f32
    %15 = vector.broadcast %cst_11 : f32 to vector<16x128xf32>
    %16 = arith.mulf %15, %9 : vector<16x128xf32>
    %17 = arith.maximumf %9, %16 : vector<16x128xf32>
    %cst_12 = arith.constant 2.000000e-01 : f32
    %18 = vector.broadcast %cst_12 : f32 to vector<16x128xf32>
    %19 = arith.mulf %18, %14 : vector<16x128xf32>
    %20 = arith.maximumf %14, %19 : vector<16x128xf32>
    %21 = arith.truncf %17 : vector<16x128xf32> to vector<16x128xbf16>
    %c0_13 = arith.constant 0 : index
    %c0_14 = arith.constant 0 : index
    %c0_15 = arith.constant 0 : index
    %22 = vector.load %arg6[%c0_13, %c0_14, %c0_15] : memref<1x16x128xbf16, #tpu.memory_space<vmem>>, vector<1x16x128xbf16>
    %23 = vector.shape_cast %22 : vector<1x16x128xbf16> to vector<16x128xbf16>
    %24 = vector.shape_cast %21 : vector<16x128xbf16> to vector<1x16x128xbf16>
    tpu.vector_store %arg6[%c0_13, %c0_14, %c0_15], %24 {strides = array<i32>} : memref<1x16x128xbf16, #tpu.memory_space<vmem>>, vector<1x16x128xbf16>,
    %25 = arith.truncf %20 : vector<16x128xf32> to vector<16x128xbf16>
    %c0_16 = arith.constant 0 : index
    %c0_17 = arith.constant 0 : index
    %c0_18 = arith.constant 0 : index
    %26 = vector.load %arg7[%c0_16, %c0_17, %c0_18] : memref<1x16x128xbf16, #tpu.memory_space<vmem>>, vector<1x16x128xbf16>
    %27 = vector.shape_cast %26 : vector<1x16x128xbf16> to vector<16x128xbf16>
    %28 = vector.shape_cast %25 : vector<16x128xbf16> to vector<1x16x128xbf16>
    tpu.vector_store %arg7[%c0_16, %c0_17, %c0_18], %28 {strides = array<i32>} : memref<1x16x128xbf16, #tpu.memory_space<vmem>>, vector<1x16x128xbf16>,
    %29 = arith.subf %17, %20 : vector<16x128xf32>
    %30 = arith.mulf %29, %29 : vector<16x128xf32>
    %cst_19 = arith.constant dense<0.000000e+00> : vector<16xf32>
    %31 = vector.multi_reduction <add>, %30, %cst_19 [1] : vector<16x128xf32> to vector<16xf32>
    %32 = vector.shape_cast %31 : vector<16xf32> to vector<16x1xf32>
    %cst_20 = arith.constant dense<0.000000e+00> : vector<1xf32>
    %33 = vector.multi_reduction <add>, %32, %cst_20 [0] : vector<16x1xf32> to vector<1xf32>
    %34 = vector.shape_cast %33 : vector<1xf32> to vector<1x1xf32>
    %c0_21 = arith.constant 0 : index
    %c0_22 = arith.constant 0 : index
    %c0_23 = arith.constant 0 : index
    %35 = vector.load %arg8[%c0_21, %c0_22, %c0_23] : memref<1x1x1xf32, #tpu.memory_space<vmem>>, vector<1x1x1xf32>
    %36 = vector.shape_cast %34 : vector<1x1xf32> to vector<1x1x1xf32>
    %37 = arith.addf %35, %36 : vector<1x1x1xf32>
    %c0_24 = arith.constant 0 : index
    %c0_25 = arith.constant 0 : index
    %c0_26 = arith.constant 0 : index
    %38 = vector.load %arg8[%c0_24, %c0_25, %c0_26] : memref<1x1x1xf32, #tpu.memory_space<vmem>>, vector<1x1x1xf32>
    tpu.vector_store %arg8[%c0_24, %c0_25, %c0_26], %37 {strides = array<i32>} : memref<1x1x1xf32, #tpu.memory_space<vmem>>, vector<1x1x1xf32>,
    %c0_i32_27 = arith.constant 0 : i32
    %39 = arith.cmpi eq, %arg1, %c0_i32_27 : i32
    %40 = arith.extui %39 : i1 to i32
    %c0_i32_28 = arith.constant 0 : i32
    %41 = arith.cmpi ne, %40, %c0_i32_28 : i32
    scf.if %41 {
      %c0_29 = arith.constant 0 : index
      %c0_30 = arith.constant 0 : index
      %c0_31 = arith.constant 0 : index
      %42 = vector.load %arg8[%c0_29, %c0_30, %c0_31] : memref<1x1x1xf32, #tpu.memory_space<vmem>>, vector<1x1x1xf32>
      %cst_32 = arith.constant 3.906250e-03 : f32
      %43 = vector.broadcast %cst_32 : f32 to vector<1x1x1xf32>
      %44 = arith.mulf %42, %43 : vector<1x1x1xf32>
      %c0_33 = arith.constant 0 : index
      %c0_34 = arith.constant 0 : index
      %c0_35 = arith.constant 0 : index
      %45 = vector.load %arg8[%c0_33, %c0_34, %c0_35] : memref<1x1x1xf32, #tpu.memory_space<vmem>>, vector<1x1x1xf32>
      tpu.vector_store %arg8[%c0_33, %c0_34, %c0_35], %44 {strides = array<i32>} : memref<1x1x1xf32, #tpu.memory_space<vmem>>, vector<1x1x1xf32>,
    } else {
    }
    return
  }
  func.func @transform_0(%arg0: i32, %arg1: i32) -> (i32, i32, i32) {
    %c0_i32 = arith.constant 0 : i32
    %c0_i32_0 = arith.constant 0 : i32
    return %arg0, %arg1, %c0_i32 : i32, i32, i32
  }
  func.func @transform_1(%arg0: i32, %arg1: i32) -> (i32, i32, i32) {
    %c0_i32 = arith.constant 0 : i32
    %c0_i32_0 = arith.constant 0 : i32
    return %arg0, %arg1, %c0_i32 : i32, i32, i32
  }
  func.func @transform_2(%arg0: i32, %arg1: i32) -> (i32, i32) {
    %c0_i32 = arith.constant 0 : i32
    %c0_i32_0 = arith.constant 0 : i32
    %c0_i32_1 = arith.constant 0 : i32
    return %c0_i32, %c0_i32_0 : i32, i32
  }
  func.func @transform_3(%arg0: i32, %arg1: i32) -> (i32, i32) {
    %c0_i32 = arith.constant 0 : i32
    %c0_i32_0 = arith.constant 0 : i32
    %c0_i32_1 = arith.constant 0 : i32
    return %c0_i32, %c0_i32_0 : i32, i32
  }
  func.func @transform_4(%arg0: i32, %arg1: i32) -> (i32, i32, i32) {
    %c0_i32 = arith.constant 0 : i32
    %c0_i32_0 = arith.constant 0 : i32
    return %arg0, %arg1, %c0_i32 : i32, i32, i32
  }
  func.func @transform_5(%arg0: i32, %arg1: i32) -> (i32, i32, i32) {
    %c0_i32 = arith.constant 0 : i32
    %c0_i32_0 = arith.constant 0 : i32
    return %arg0, %arg1, %c0_i32 : i32, i32, i32
  }
  func.func @transform_6(%arg0: i32, %arg1: i32) -> (i32, i32, i32) {
    %c0_i32 = arith.constant 0 : i32
    %c0_i32_0 = arith.constant 0 : i32
    %c0_i32_1 = arith.constant 0 : i32
    return %arg0, %c0_i32, %c0_i32_0 : i32, i32, i32
  }
}

module attributes {stable_mosaic.version = 11 : i64} {
  func.func @_fused_layer_mse_only_kernel(%arg0: i32, %arg1: i32, %arg2: memref<1x16x256xbf16, #tpu.memory_space<vmem>>, %arg3: memref<1x16x256xbf16, #tpu.memory_space<vmem>>, %arg4: memref<256x128xbf16, #tpu.memory_space<vmem>>, %arg5: memref<1x128xf32, #tpu.memory_space<vmem>>, %arg6: memref<1x1x1xf32, #tpu.memory_space<vmem>>) attributes {dimension_semantics = [#tpu.dimension_semantics<parallel>, #tpu.dimension_semantics<arbitrary>], iteration_bounds = array<i64: 2, 1>, scalar_prefetch = 0 : i64, scratch_operands = 0 : i64, tpu.core_type = #tpu.core_type<tc>, window_params = [{transform_indices = @transform_0, window_bounds = array<i64: 1, 16, 256>}, {transform_indices = @transform_1, window_bounds = array<i64: 1, 16, 256>}, {pipeline_mode = #tpu.pipeline_mode<synchronous>, transform_indices = @transform_2, window_bounds = array<i64: 256, 128>}, {pipeline_mode = #tpu.pipeline_mode<synchronous>, transform_indices = @transform_3, window_bounds = array<i64: 1, 128>}, {transform_indices = @transform_4, window_bounds = array<i64: 1, 1, 1>}]} {
    %c0_i32 = arith.constant 0 : i32
    %0 = arith.cmpi eq, %arg1, %c0_i32 : i32
    %1 = arith.extui %0 : i1 to i32
    %c0_i32_0 = arith.constant 0 : i32
    %2 = arith.cmpi ne, %1, %c0_i32_0 : i32
    scf.if %2 {
      %cst_23 = arith.constant 0.000000e+00 : f32
      %34 = vector.broadcast %cst_23 : f32 to vector<1x1x1xf32>
      %c0_24 = arith.constant 0 : index
      %c0_25 = arith.constant 0 : index
      %c0_26 = arith.constant 0 : index
      %35 = vector.load %arg6[%c0_24, %c0_25, %c0_26] : memref<1x1x1xf32, #tpu.memory_space<vmem>>, vector<1x1x1xf32>
      tpu.vector_store %arg6[%c0_24, %c0_25, %c0_26], %34 {strides = array<i32>} : memref<1x1x1xf32, #tpu.memory_space<vmem>>, vector<1x1x1xf32>,
    } else {
    }
    %c0 = arith.constant 0 : index
    %c0_1 = arith.constant 0 : index
    %3 = vector.load %arg4[%c0, %c0_1] : memref<256x128xbf16, #tpu.memory_space<vmem>>, vector<256x128xbf16>
    %c0_2 = arith.constant 0 : index
    %c0_3 = arith.constant 0 : index
    %4 = vector.load %arg5[%c0_2, %c0_3] : memref<1x128xf32, #tpu.memory_space<vmem>>, vector<1x128xf32>
    %c0_4 = arith.constant 0 : index
    %c0_5 = arith.constant 0 : index
    %c0_6 = arith.constant 0 : index
    %5 = vector.load %arg2[%c0_4, %c0_5, %c0_6] : memref<1x16x256xbf16, #tpu.memory_space<vmem>>, vector<1x16x256xbf16>
    %6 = vector.shape_cast %5 : vector<1x16x256xbf16> to vector<16x256xbf16>
    %cst = arith.constant dense<0.000000e+00> : vector<16x128xf32>
    %7 = tpu.matmul %6, %3, %cst {dimension_numbers = #tpu.dot_dimension_numbers<[1], [0], [0], [1], [0, 0, 1, 1], [], []>} : vector<16x256xbf16>, vector<256x128xbf16>, vector<16x128xf32> -> vector<16x128xf32>
    %8 = vector.broadcast %4 : vector<1x128xf32> to vector<16x128xf32>
    %9 = arith.addf %7, %8 : vector<16x128xf32>
    %c0_7 = arith.constant 0 : index
    %c0_8 = arith.constant 0 : index
    %c0_9 = arith.constant 0 : index
    %10 = vector.load %arg3[%c0_7, %c0_8, %c0_9] : memref<1x16x256xbf16, #tpu.memory_space<vmem>>, vector<1x16x256xbf16>
    %11 = vector.shape_cast %10 : vector<1x16x256xbf16> to vector<16x256xbf16>
    %cst_10 = arith.constant dense<0.000000e+00> : vector<16x128xf32>
    %12 = tpu.matmul %11, %3, %cst_10 {dimension_numbers = #tpu.dot_dimension_numbers<[1], [0], [0], [1], [0, 0, 1, 1], [], []>} : vector<16x256xbf16>, vector<256x128xbf16>, vector<16x128xf32> -> vector<16x128xf32>
    %13 = vector.broadcast %4 : vector<1x128xf32> to vector<16x128xf32>
    %14 = arith.addf %12, %13 : vector<16x128xf32>
    %cst_11 = arith.constant 2.000000e-01 : f32
    %15 = vector.broadcast %cst_11 : f32 to vector<16x128xf32>
    %16 = arith.mulf %15, %9 : vector<16x128xf32>
    %17 = arith.maximumf %9, %16 : vector<16x128xf32>
    %cst_12 = arith.constant 2.000000e-01 : f32
    %18 = vector.broadcast %cst_12 : f32 to vector<16x128xf32>
    %19 = arith.mulf %18, %14 : vector<16x128xf32>
    %20 = arith.maximumf %14, %19 : vector<16x128xf32>
    %21 = arith.subf %17, %20 : vector<16x128xf32>
    %22 = arith.mulf %21, %21 : vector<16x128xf32>
    %cst_13 = arith.constant dense<0.000000e+00> : vector<16xf32>
    %23 = vector.multi_reduction <add>, %22, %cst_13 [1] : vector<16x128xf32> to vector<16xf32>
    %24 = vector.shape_cast %23 : vector<16xf32> to vector<16x1xf32>
    %cst_14 = arith.constant dense<0.000000e+00> : vector<1xf32>
    %25 = vector.multi_reduction <add>, %24, %cst_14 [0] : vector<16x1xf32> to vector<1xf32>
    %26 = vector.shape_cast %25 : vector<1xf32> to vector<1x1xf32>
    %c0_15 = arith.constant 0 : index
    %c0_16 = arith.constant 0 : index
    %c0_17 = arith.constant 0 : index
    %27 = vector.load %arg6[%c0_15, %c0_16, %c0_17] : memref<1x1x1xf32, #tpu.memory_space<vmem>>, vector<1x1x1xf32>
    %28 = vector.shape_cast %26 : vector<1x1xf32> to vector<1x1x1xf32>
    %29 = arith.addf %27, %28 : vector<1x1x1xf32>
    %c0_18 = arith.constant 0 : index
    %c0_19 = arith.constant 0 : index
    %c0_20 = arith.constant 0 : index
    %30 = vector.load %arg6[%c0_18, %c0_19, %c0_20] : memref<1x1x1xf32, #tpu.memory_space<vmem>>, vector<1x1x1xf32>
    tpu.vector_store %arg6[%c0_18, %c0_19, %c0_20], %29 {strides = array<i32>} : memref<1x1x1xf32, #tpu.memory_space<vmem>>, vector<1x1x1xf32>,
    %c0_i32_21 = arith.constant 0 : i32
    %31 = arith.cmpi eq, %arg1, %c0_i32_21 : i32
    %32 = arith.extui %31 : i1 to i32
    %c0_i32_22 = arith.constant 0 : i32
    %33 = arith.cmpi ne, %32, %c0_i32_22 : i32
    scf.if %33 {
      %c0_23 = arith.constant 0 : index
      %c0_24 = arith.constant 0 : index
      %c0_25 = arith.constant 0 : index
      %34 = vector.load %arg6[%c0_23, %c0_24, %c0_25] : memref<1x1x1xf32, #tpu.memory_space<vmem>>, vector<1x1x1xf32>
      %cst_26 = arith.constant 7.812500e-03 : f32
      %35 = vector.broadcast %cst_26 : f32 to vector<1x1x1xf32>
      %36 = arith.mulf %34, %35 : vector<1x1x1xf32>
      %c0_27 = arith.constant 0 : index
      %c0_28 = arith.constant 0 : index
      %c0_29 = arith.constant 0 : index
      %37 = vector.load %arg6[%c0_27, %c0_28, %c0_29] : memref<1x1x1xf32, #tpu.memory_space<vmem>>, vector<1x1x1xf32>
      tpu.vector_store %arg6[%c0_27, %c0_28, %c0_29], %36 {strides = array<i32>} : memref<1x1x1xf32, #tpu.memory_space<vmem>>, vector<1x1x1xf32>,
    } else {
    }
    return
  }
  func.func @transform_0(%arg0: i32, %arg1: i32) -> (i32, i32, i32) {
    %c0_i32 = arith.constant 0 : i32
    %c0_i32_0 = arith.constant 0 : i32
    return %arg0, %arg1, %c0_i32 : i32, i32, i32
  }
  func.func @transform_1(%arg0: i32, %arg1: i32) -> (i32, i32, i32) {
    %c0_i32 = arith.constant 0 : i32
    %c0_i32_0 = arith.constant 0 : i32
    return %arg0, %arg1, %c0_i32 : i32, i32, i32
  }
  func.func @transform_2(%arg0: i32, %arg1: i32) -> (i32, i32) {
    %c0_i32 = arith.constant 0 : i32
    %c0_i32_0 = arith.constant 0 : i32
    %c0_i32_1 = arith.constant 0 : i32
    return %c0_i32, %c0_i32_0 : i32, i32
  }
  func.func @transform_3(%arg0: i32, %arg1: i32) -> (i32, i32) {
    %c0_i32 = arith.constant 0 : i32
    %c0_i32_0 = arith.constant 0 : i32
    %c0_i32_1 = arith.constant 0 : i32
    return %c0_i32, %c0_i32_0 : i32, i32
  }
  func.func @transform_4(%arg0: i32, %arg1: i32) -> (i32, i32, i32) {
    %c0_i32 = arith.constant 0 : i32
    %c0_i32_0 = arith.constant 0 : i32
    %c0_i32_1 = arith.constant 0 : i32
    return %arg0, %c0_i32, %c0_i32_0 : i32, i32, i32
  }
}

</mosaic_0001>

<llo_original>
// kernel: discriminator_perceptual_loss.3
$region0: #{discriminator_perceptual_loss.3}
  #allocation0 [shape = 'u32[]', space=smem, size = 0x4, offset = 0x4, fixed_abs, tag = 'smem constant byte address 0x4 - core index']
  #allocation1 [shape = 'u32[144,128]{1,0:T(1,128)}', space=vmem, size = 0x12000, scoped, tag = 'internal scratch']
  %s0 = inlined_call_operand.vmem [shape: bf16[2,64,128], index: 0, kind: input, shape index: {}]
  %s1 = inlined_call_operand.vmem [shape: bf16[2,64,128], index: 1, kind: input, shape index: {}]
  %s2 = inlined_call_operand.vmem [shape: bf16[128,128], index: 2, kind: input, shape index: {}]
  %s3 = inlined_call_operand.vmem [shape: f32[1,128], index: 3, kind: input, shape index: {}]
  %s4 = inlined_call_operand.vmem [shape: bf16[2,64,128], index: 4, kind: output, shape index: {0}]
  %s5 = inlined_call_operand.vmem [shape: bf16[2,64,128], index: 5, kind: output, shape index: {1}]
  %s6 = inlined_call_operand.vmem [shape: f32[2,1,1], index: 6, kind: output, shape index: {2}]
  %7 = xla_tuple %s4, %s5, %s6
  %s8 = sld [smem:[#allocation0]]
  $region73: #{discriminator_perceptual_loss.3} parent=0
    _
  %s10 = ssub.s32 1, %s8
  %s11 = scalar_select 0, %s10, %s8
  loop: start=0, step=1, limit=4
  $region2: #{discriminator_perceptual_loss.3} parent=0 // loop_pre_header
    _
  $region3: #{discriminator_perceptual_loss.3} parent=0 // loop_header
    %s13 = sphi 0, %s17
    %p14 = scmp.ge.s32.totalorder %s13, 4
    %s20 = sphi 0, %s32
    %s21 = sphi 0, %s28
    %s22 = sphi 0, %s20
    %s23 = sphi 0, %s21
    %s24 = sphi 0, %s22
    %s25 = sphi 0, %s23
    %s37 = sphi 0, %s39
    %s40 = sphi 0, %s37
    %s41 = sphi 0, %s40
    %s57 = sphi 0, %s41
    %s65 = sphi 0, %s67
    %s68 = sphi 0, %s65
    %s69 = sphi 0, %s68
    %s85 = sphi 0, %s69
    %s89 = sphi 0, %s89
    %s91 = sphi 0, %s89
    %s92 = sphi 0, %s91
    %s106 = sphi 0, %s92
    %s110 = sphi 0, %s110
    %s112 = sphi 0, %s110
    %s113 = sphi 0, %s112
    %s127 = sphi 0, %s113
    %s135 = sphi 0, %s137
    %s138 = sphi 0, %s135
    %s139 = sphi 0, %s138
    %s155 = sphi 0, %s139
    %s163 = sphi 0, %s165
    %s166 = sphi 0, %s163
    %s167 = sphi 0, %s166
    %s183 = sphi 0, %s167
    %s189 = sphi 0, %s191
    %s192 = sphi 0, %s189
    %s193 = sphi 0, %s192
    %s209 = sphi 0, %s193
  $region4: #{discriminator_perceptual_loss.3} parent=0 // loop_header_branch
    %16 = sbr.rel (%p14) target = $region8
  $region5: #{discriminator_perceptual_loss.3} parent=0 // loop_body
    %s18 = ssub.s32 %s13, 1
    %s19 = ssub.s32 %s13, 2
    %s26 = sadd.s32 1, %s21
    %p27 = scmp.ge.s32.totalorder %s26, 1
    %s28 = scalar_select %p27, 0, %s26
    %s29 = sadd.s32 1, %s20
    %s30 = scalar_select %p27, %s29, %s20
    %p31 = scmp.ge.s32.totalorder %s30, 2
    %s32 = scalar_select %p31, 0, %s30
    %s33 = ssub.s32 %s20, %s32
    %s34 = ssub.s32 %s21, %s28
    %s35 = sor.u32 %s33, %s34
    %p36 = scmp.eq.s32.totalorder %s35, 0
    %s38 = sadd.s32 %s37, 1
    %s39 = scalar_select %p36, %s37, %s38
    %p42 = pneg %p36
    %p43 = scmp.eq.s32.totalorder %s13, 1
    %p44 = por %p42, %p43
    %p45 = scmp.ne.s32.totalorder %s37, %s40
    %p46 = scmp.eq.s32.totalorder %s13, 0
    %p47 = por %p45, %p46
    %p48 = scmp.ne.s32.totalorder %s37, %s40
    %p49 = scmp.eq.s32.totalorder %s18, 1
    %p50 = por %p48, %p49
    %p51 = scmp.ne.s32.totalorder %s40, %s41
    %p52 = scmp.eq.s32.totalorder %s18, 0
    %p53 = por %p51, %p52
    %p54 = scmp.ne.s32.totalorder %s40, %s41
    %p55 = scmp.eq.s32.totalorder %s19, 1
    %p56 = por %p54, %p55
    %p58 = scmp.ne.s32.totalorder %s41, %s57
    %p59 = scmp.eq.s32.totalorder %s19, 0
    %p60 = por %p58, %p59
    %s61 = ssub.s32 %s20, %s32
    %s62 = ssub.s32 %s21, %s28
    %s63 = sor.u32 %s61, %s62
    %p64 = scmp.eq.s32.totalorder %s63, 0
    %s66 = sadd.s32 %s65, 1
    %s67 = scalar_select %p64, %s65, %s66
    %p70 = pneg %p64
    %p71 = scmp.eq.s32.totalorder %s13, 1
    %p72 = por %p70, %p71
    %p73 = scmp.ne.s32.totalorder %s65, %s68
    %p74 = scmp.eq.s32.totalorder %s13, 0
    %p75 = por %p73, %p74
    %p76 = scmp.ne.s32.totalorder %s65, %s68
    %p77 = scmp.eq.s32.totalorder %s18, 1
    %p78 = por %p76, %p77
    %p79 = scmp.ne.s32.totalorder %s68, %s69
    %p80 = scmp.eq.s32.totalorder %s18, 0
    %p81 = por %p79, %p80
    %p82 = scmp.ne.s32.totalorder %s68, %s69
    %p83 = scmp.eq.s32.totalorder %s19, 1
    %p84 = por %p82, %p83
    %p86 = scmp.ne.s32.totalorder %s69, %s85
    %p87 = scmp.eq.s32.totalorder %s19, 0
    %p88 = por %p86, %p87
    %s90 = sadd.s32 %s89, 1
    %p93 = scmp.eq.s32.totalorder %s13, 1
    %p94 = scmp.ne.s32.totalorder %s89, %s91
    %p95 = scmp.eq.s32.totalorder %s13, 0
    %p96 = por %p94, %p95
    %p97 = scmp.ne.s32.totalorder %s89, %s91
    %p98 = scmp.eq.s32.totalorder %s18, 1
    %p99 = por %p97, %p98
    %p100 = scmp.ne.s32.totalorder %s91, %s92
    %p101 = scmp.eq.s32.totalorder %s18, 0
    %p102 = por %p100, %p101
    %p103 = scmp.ne.s32.totalorder %s91, %s92
    %p104 = scmp.eq.s32.totalorder %s19, 1
    %p105 = por %p103, %p104
    %p107 = scmp.ne.s32.totalorder %s92, %s106
    %p108 = scmp.eq.s32.totalorder %s19, 0
    %p109 = por %p107, %p108
    %s111 = sadd.s32 %s110, 1
    %p114 = scmp.eq.s32.totalorder %s13, 1
    %p115 = scmp.ne.s32.totalorder %s110, %s112
    %p116 = scmp.eq.s32.totalorder %s13, 0
    %p117 = por %p115, %p116
    %p118 = scmp.ne.s32.totalorder %s110, %s112
    %p119 = scmp.eq.s32.totalorder %s18, 1
    %p120 = por %p118, %p119
    %p121 = scmp.ne.s32.totalorder %s112, %s113
    %p122 = scmp.eq.s32.totalorder %s18, 0
    %p123 = por %p121, %p122
    %p124 = scmp.ne.s32.totalorder %s112, %s113
    %p125 = scmp.eq.s32.totalorder %s19, 1
    %p126 = por %p124, %p125
    %p128 = scmp.ne.s32.totalorder %s113, %s127
    %p129 = scmp.eq.s32.totalorder %s19, 0
    %p130 = por %p128, %p129
    %s131 = ssub.s32 %s20, %s32
    %s132 = ssub.s32 %s21, %s28
    %s133 = sor.u32 %s131, %s132
    %p134 = scmp.eq.s32.totalorder %s133, 0
    %s136 = sadd.s32 %s135, 1
    %s137 = scalar_select %p134, %s135, %s136
    %p140 = pneg %p134
    %p141 = scmp.eq.s32.totalorder %s13, 1
    %p142 = por %p140, %p141
    %p143 = scmp.ne.s32.totalorder %s135, %s138
    %p144 = scmp.eq.s32.totalorder %s13, 0
    %p145 = por %p143, %p144
    %p146 = scmp.ne.s32.totalorder %s135, %s138
    %p147 = scmp.eq.s32.totalorder %s18, 1
    %p148 = por %p146, %p147
    %p149 = scmp.ne.s32.totalorder %s138, %s139
    %p150 = scmp.eq.s32.totalorder %s18, 0
    %p151 = por %p149, %p150
    %p152 = scmp.ne.s32.totalorder %s138, %s139
    %p153 = scmp.eq.s32.totalorder %s19, 1
    %p154 = por %p152, %p153
    %p156 = scmp.ne.s32.totalorder %s139, %s155
    %p157 = scmp.eq.s32.totalorder %s19, 0
    %p158 = por %p156, %p157
    %s159 = ssub.s32 %s20, %s32
    %s160 = ssub.s32 %s21, %s28
    %s161 = sor.u32 %s159, %s160
    %p162 = scmp.eq.s32.totalorder %s161, 0
    %s164 = sadd.s32 %s163, 1
    %s165 = scalar_select %p162, %s163, %s164
    %p168 = pneg %p162
    %p169 = scmp.eq.s32.totalorder %s13, 1
    %p170 = por %p168, %p169
    %p171 = scmp.ne.s32.totalorder %s163, %s166
    %p172 = scmp.eq.s32.totalorder %s13, 0
    %p173 = por %p171, %p172
    %p174 = scmp.ne.s32.totalorder %s163, %s166
    %p175 = scmp.eq.s32.totalorder %s18, 1
    %p176 = por %p174, %p175
    %p177 = scmp.ne.s32.totalorder %s166, %s167
    %p178 = scmp.eq.s32.totalorder %s18, 0
    %p179 = por %p177, %p178
    %p180 = scmp.ne.s32.totalorder %s166, %s167
    %p181 = scmp.eq.s32.totalorder %s19, 1
    %p182 = por %p180, %p181
    %p184 = scmp.ne.s32.totalorder %s167, %s183
    %p185 = scmp.eq.s32.totalorder %s19, 0
    %p186 = por %p184, %p185
    %s187 = ssub.s32 %s20, %s32
    %p188 = scmp.eq.s32.totalorder %s187, 0
    %s190 = sadd.s32 %s189, 1
    %s191 = scalar_select %p188, %s189, %s190
    %p194 = pneg %p188
    %p195 = scmp.eq.s32.totalorder %s13, 1
    %p196 = por %p194, %p195
    %p197 = scmp.ne.s32.totalorder %s189, %s192
    %p198 = scmp.eq.s32.totalorder %s13, 0
    %p199 = por %p197, %p198
    %p200 = scmp.ne.s32.totalorder %s189, %s192
    %p201 = scmp.eq.s32.totalorder %s18, 1
    %p202 = por %p200, %p201
    %p203 = scmp.ne.s32.totalorder %s192, %s193
    %p204 = scmp.eq.s32.totalorder %s18, 0
    %p205 = por %p203, %p204
    %p206 = scmp.ne.s32.totalorder %s192, %s193
    %p207 = scmp.eq.s32.totalorder %s19, 1
    %p208 = por %p206, %p207
    %p210 = scmp.ne.s32.totalorder %s193, %s209
    %p211 = scmp.eq.s32.totalorder %s19, 0
    %p212 = por %p210, %p211
    %p213 = scmp.le.s32.totalorder 1, %s13
    %p214 = scmp.lt.s32.totalorder %s13, 3
    %p215 = pnand %p213, %p214
    %p216 = pneg %p215
    // Predicated region
    $region9: #{discriminator_perceptual_loss.3} parent=5 // pred_check
      _
    $region10: #{discriminator_perceptual_loss.3} parent=5 // pred_check_branch
      %218 = sbr.rel (%p215) target = $region12
    $region11: #{discriminator_perceptual_loss.3} parent=5 // pred_region
      %s219 = ssub.s32 %s13, 1
      // Predicated region
      $region13: #{discriminator_perceptual_loss.3} parent=11 // pred_check
        %p220 = pneg %p102
      $region14: #{discriminator_perceptual_loss.3} parent=11 // pred_check_branch
        %222 = sbr.rel (%p220) target = $region16
      $region15: #{discriminator_perceptual_loss.3} parent=11 // pred_region
        _
      $region16: #{discriminator_perceptual_loss.3} parent=11 // pred_fallthru
        _
      // Predicated region
      $region17: #{discriminator_perceptual_loss.3} parent=11 // pred_check
        %p223 = pneg %p123
      $region18: #{discriminator_perceptual_loss.3} parent=11 // pred_check_branch
        %225 = sbr.rel (%p223) target = $region20
      $region19: #{discriminator_perceptual_loss.3} parent=11 // pred_region
        _
      $region20: #{discriminator_perceptual_loss.3} parent=11 // pred_fallthru
        _
    $region12: #{discriminator_perceptual_loss.3} parent=5 // pred_fallthru
      _
    %p226 = scmp.lt.s32.totalorder %s13, 2
    // Predicated region
    $region21: #{discriminator_perceptual_loss.3} parent=5 // pred_check
      %p227 = pneg %p226
    $region22: #{discriminator_perceptual_loss.3} parent=5 // pred_check_branch
      %229 = sbr.rel (%p227) target = $region24
    $region23: #{discriminator_perceptual_loss.3} parent=5 // pred_region
      // Predicated region
      $region25: #{discriminator_perceptual_loss.3} parent=23 // pred_check
        %p230 = pneg %p47
      $region26: #{discriminator_perceptual_loss.3} parent=23 // pred_check_branch
        %232 = sbr.rel (%p230) target = $region28
      $region27: #{discriminator_perceptual_loss.3} parent=23 // pred_region
        %s233 = smul.u32 8, %s21
        %p234 = scmp.lt.s32.totalorder %s20, 1
        %s235 = scalar_select %p234, %s20, 1
        %p236 = scmp.lt.s32.totalorder %s233, 7
        %s237 = scalar_select %p236, %s233, 7
        %s238 = smul.addr %s235, 8
        %s239 = sadd.s32 %s237, %s238
        %s240 = smul.addr %s239, 4
        %s241 = scalar_lea.vmem %s0, %s240
        %s242 = smul.u32 8, %s21
      $region28: #{discriminator_perceptual_loss.3} parent=23 // pred_fallthru
        _
      // Predicated region
      $region29: #{discriminator_perceptual_loss.3} parent=23 // pred_check
        %p243 = pneg %p75
      $region30: #{discriminator_perceptual_loss.3} parent=23 // pred_check_branch
        %245 = sbr.rel (%p243) target = $region32
      $region31: #{discriminator_perceptual_loss.3} parent=23 // pred_region
        %s246 = smul.u32 8, %s21
        %p247 = scmp.lt.s32.totalorder %s20, 1
        %s248 = scalar_select %p247, %s20, 1
        %p249 = scmp.lt.s32.totalorder %s246, 7
        %s250 = scalar_select %p249, %s246, 7
        %s251 = smul.addr %s248, 8
        %s252 = sadd.s32 %s250, %s251
        %s253 = smul.addr %s252, 4
        %s254 = scalar_lea.vmem %s1, %s253
        %s255 = smul.u32 8, %s21
      $region32: #{discriminator_perceptual_loss.3} parent=23 // pred_fallthru
        _
    $region24: #{discriminator_perceptual_loss.3} parent=5 // pred_fallthru
      _
    %p256 = scmp.le.s32.totalorder 1, %s13
    %p257 = scmp.lt.s32.totalorder %s13, 3
    %p258 = pnand %p256, %p257
    %p259 = pneg %p258
    // Predicated region
    $region33: #{discriminator_perceptual_loss.3} parent=5 // pred_check
      _
    $region34: #{discriminator_perceptual_loss.3} parent=5 // pred_check_branch
      %261 = sbr.rel (%p258) target = $region36
    $region35: #{discriminator_perceptual_loss.3} parent=5 // pred_region
      %s262 = ssub.s32 %s13, 1
      %s263 = smul.u32 8, %s23
      %p264 = scmp.lt.s32.totalorder %s22, 1
      %s265 = scalar_select %p264, %s22, 1
      %p266 = scmp.lt.s32.totalorder %s263, 7
      %s267 = scalar_select %p266, %s263, 7
      %s268 = smul.addr %s265, 8
      %s269 = sadd.s32 %s267, %s268
      %s270 = smul.addr %s269, 4
      %s271 = scalar_lea.vmem %s0, %s270
      %p272 = pneg %p53
      %p273 = pneg %p50
      %s274 = smul.u32 8, %s23
      %p275 = scmp.lt.s32.totalorder %s22, 1
      %s276 = scalar_select %p275, %s22, 1
      %p277 = scmp.lt.s32.totalorder %s274, 7
      %s278 = scalar_select %p277, %s274, 7
      %s279 = smul.addr %s276, 8
      %s280 = sadd.s32 %s278, %s279
      %s281 = smul.addr %s280, 4
      %s282 = scalar_lea.vmem %s1, %s281
      %p283 = pneg %p81
      %p284 = pneg %p78
      %p285 = pneg %p102
      %p286 = pneg %p99
      %p287 = pneg %p123
      %p288 = pneg %p120
      %p289 = pneg %p151
      %p290 = pneg %p148
      %s291 = smul.u32 8, %s23
      %p292 = scmp.lt.s32.totalorder %s22, 1
      %s293 = scalar_select %p292, %s22, 1
      %p294 = scmp.lt.s32.totalorder %s291, 7
      %s295 = scalar_select %p294, %s291, 7
      %s296 = smul.addr %s293, 8
      %s297 = sadd.s32 %s295, %s296
      %s298 = smul.addr %s297, 4
      %s299 = scalar_lea.vmem %s4, %s298
      %p300 = pneg %p179
      %p301 = pneg %p176
      %s302 = smul.u32 8, %s23
      %p303 = scmp.lt.s32.totalorder %s22, 1
      %s304 = scalar_select %p303, %s22, 1
      %p305 = scmp.lt.s32.totalorder %s302, 7
      %s306 = scalar_select %p305, %s302, 7
      %s307 = smul.addr %s304, 8
      %s308 = sadd.s32 %s306, %s307
      %s309 = smul.addr %s308, 4
      %s310 = scalar_lea.vmem %s5, %s309
      %p311 = pneg %p205
      %p312 = pneg %p202
      %p313 = scmp.lt.s32.totalorder %s22, 1
      %s314 = scalar_select %p313, %s22, 1
      %s315 = scalar_lea.vmem %s6, %s314
      %s316 = smul.u32 8, %s23
      %p317 = scmp.lt.s32.totalorder %s22, 1
      %s318 = scalar_select %p317, %s22, 1
      %p319 = scmp.lt.s32.totalorder %s316, 7
      %s320 = scalar_select %p319, %s316, 7
      %s321 = smul.addr %s318, 8
      %s322 = sadd.s32 %s320, %s321
      %s323 = smul.addr %s322, 4
      %s324 = scalar_lea.vmem %s0, %s323
      %s325 = smul.u32 8, %s23
      %s326 = smul.u32 8, %s23
      %p327 = scmp.lt.s32.totalorder %s22, 1
      %s328 = scalar_select %p327, %s22, 1
      %p329 = scmp.lt.s32.totalorder %s326, 7
      %s330 = scalar_select %p329, %s326, 7
      %s331 = smul.addr %s328, 8
      %s332 = sadd.s32 %s330, %s331
      %s333 = smul.addr %s332, 4
      %s334 = scalar_lea.vmem %s1, %s333
      %s335 = smul.u32 8, %s23
      %s336 = smul.u32 8, %s23
      %p337 = scmp.lt.s32.totalorder %s22, 1
      %s338 = scalar_select %p337, %s22, 1
      %p339 = scmp.lt.s32.totalorder %s336, 7
      %s340 = scalar_select %p339, %s336, 7
      %s341 = smul.addr %s338, 8
      %s342 = sadd.s32 %s340, %s341
      %s343 = smul.addr %s342, 4
      %s344 = scalar_lea.vmem %s4, %s343
      %s345 = smul.u32 8, %s23
      %s346 = smul.u32 8, %s23
      %p347 = scmp.lt.s32.totalorder %s22, 1
      %s348 = scalar_select %p347, %s22, 1
      %p349 = scmp.lt.s32.totalorder %s346, 7
      %s350 = scalar_select %p349, %s346, 7
      %s351 = smul.addr %s348, 8
      %s352 = sadd.s32 %s350, %s351
      %s353 = smul.addr %s352, 4
      %s354 = scalar_lea.vmem %s5, %s353
      %s355 = smul.u32 8, %s23
      %p356 = scmp.lt.s32.totalorder %s22, 1
      %s357 = scalar_select %p356, %s22, 1
      %s358 = scalar_lea.vmem %s6, %s357
      %p360 = scmp.eq.s32.totalorder %s23, 0
      // Predicated region
      $region37: #{discriminator_perceptual_loss.3} parent=35 // pred_check
        %p361 = pneg %p360
      $region38: #{discriminator_perceptual_loss.3} parent=35 // pred_check_branch
        %363 = sbr.rel (%p361) target = $region40
      $region39: #{discriminator_perceptual_loss.3} parent=35 // pred_region
        %vm364 = vcmask 0
        %365 = vst.msk [vmem:[%s358] sm:$0x1] %vm364, 0.0
      $region40: #{discriminator_perceptual_loss.3} parent=35 // pred_fallthru
        _
      %v366 = vld [vmem:[%s2] sm:$0xf]
      %v367 = vld [vmem:[%s2 + $0x4] sm:$0xf]
      %v368 = vld [vmem:[%s2 + $0x8] sm:$0xf]
      %v369 = vld [vmem:[%s2 + $0xc] sm:$0xf]
      %v370 = vld [vmem:[%s2 + $0x10] sm:$0xf]
      %v371 = vld [vmem:[%s2 + $0x14] sm:$0xf]
      %v372 = vld [vmem:[%s2 + $0x18] sm:$0xf]
      %v373 = vld [vmem:[%s2 + $0x1c] sm:$0xf]
      %v374 = vld [vmem:[%s2 + $0x20] sm:$0xf]
      %v375 = vld [vmem:[%s2 + $0x24] sm:$0xf]
      %v376 = vld [vmem:[%s2 + $0x28] sm:$0xf]
      %v377 = vld [vmem:[%s2 + $0x2c] sm:$0xf]
      %v378 = vld [vmem:[%s2 + $0x30] sm:$0xf]
      %v379 = vld [vmem:[%s2 + $0x34] sm:$0xf]
      %v380 = vld [vmem:[%s2 + $0x38] sm:$0xf]
      %v381 = vld [vmem:[%s2 + $0x3c] sm:$0xf]
      %v382 = vld [vmem:[%s3] sm:$0x1]
      %v383 = vld [vmem:[%s324] sm:$0xf]
      %v384 = vld [vmem:[%s324 + $0x4] sm:$0xf]
      %v385 = vld [vmem:[%s324 + $0x8] sm:$0xf]
      %v386 = vld [vmem:[%s324 + $0xc] sm:$0xf]
      %v387 = vld [vmem:[%s324 + $0x10] sm:$0xf]
      %v388 = vld [vmem:[%s324 + $0x14] sm:$0xf]
      %v389 = vld [vmem:[%s324 + $0x18] sm:$0xf]
      %v390 = vld [vmem:[%s324 + $0x1c] sm:$0xf]
      %v392 = vlaneseq
      %v393 = vshrl.u32 %v392, 7
      %v394 = vsub.s32 0, %v393
      %v395 = vrot.slane %v382, %v394
      %v405 = vunpack.c.l.b16 %v383
      %v406 = vunpack.c.l.b16 %v384
      %v407 = vunpack.c.l.b16 %v385
      %v408 = vunpack.c.l.b16 %v386
      %v409 = vunpack.c.l.b16 %v387
      %v410 = vunpack.c.l.b16 %v388
      %v411 = vunpack.c.l.b16 %v389
      %v412 = vunpack.c.l.b16 %v390
      %v413 = vpack.c.b16 %v406, %v405
      %v414 = vpack.c.b16 %v408, %v407
      %v415 = vpack.c.b16 %v410, %v409
      %v416 = vpack.c.b16 %v412, %v411
      %v437 = vunpack.c.l.b16 %v366
      %v438 = vunpack.c.l.b16 %v367
      %v439 = vunpack.c.l.b16 %v368
      %v440 = vunpack.c.l.b16 %v369
      %v441 = vunpack.c.l.b16 %v370
      %v442 = vunpack.c.l.b16 %v371
      %v443 = vunpack.c.l.b16 %v372
      %v444 = vunpack.c.l.b16 %v373
      %v445 = vunpack.c.l.b16 %v374
      %v446 = vunpack.c.l.b16 %v375
      %v447 = vunpack.c.l.b16 %v376
      %v448 = vunpack.c.l.b16 %v377
      %v449 = vunpack.c.l.b16 %v378
      %v450 = vunpack.c.l.b16 %v379
      %v451 = vunpack.c.l.b16 %v380
      %v452 = vunpack.c.l.b16 %v381
      %v453 = vpack.c.b16 %v438, %v437
      %v454 = vpack.c.b16 %v440, %v439
      %v455 = vpack.c.b16 %v442, %v441
      %v456 = vpack.c.b16 %v444, %v443
      %v457 = vpack.c.b16 %v446, %v445
      %v458 = vpack.c.b16 %v448, %v447
      %v459 = vpack.c.b16 %v450, %v449
      %v460 = vpack.c.b16 %v452, %v451
      %469 = vmatprep.subr.bf16.mxu0 0
      %470 = vmatpush1.bf16.msra.mxu0 %v460
      %471 = vmatprep.subr.bf16.mxu0 0
      %472 = vmatpush1.bf16.msra.mxu0 %v459
      %473 = vmatprep.subr.bf16.mxu0 0
      %474 = vmatpush1.bf16.msra.mxu0 %v458
      %475 = vmatprep.subr.bf16.mxu0 0
      %476 = vmatpush1.bf16.msra.mxu0 %v457
      %477 = vmatprep.subr.bf16.mxu0 0
      %478 = vmatpush1.bf16.msra.mxu0 %v456
      %479 = vmatprep.subr.bf16.mxu0 0
      %480 = vmatpush1.bf16.msra.mxu0 %v455
      %481 = vmatprep.subr.bf16.mxu0 0
      %482 = vmatpush1.bf16.msra.mxu0 %v454
      %483 = vmatprep.subr.bf16.mxu0 0
      %484 = vmatpush1.bf16.msra.mxu0 %v453
      %485 = vmatprep.subr.bf16.mxu0 0
      %486 = vmatpush2.bf16.msra.mxu0 0
      %487 = vmatprep.subr.bf16.mxu0 0
      %488 = vmatpush2.bf16.msra.mxu0 0
      %489 = vmatprep.subr.bf16.mxu0 0
      %490 = vmatpush2.bf16.msra.mxu0 0
      %491 = vmatprep.subr.bf16.mxu0 0
      %492 = vmatpush2.bf16.msra.mxu0 0
      %493 = vmatprep.subr.bf16.mxu0 0
      %494 = vmatpush2.bf16.msra.mxu0 0
      %495 = vmatprep.subr.bf16.mxu0 0
      %496 = vmatpush2.bf16.msra.mxu0 0
      %497 = vmatprep.subr.bf16.mxu0 0
      %498 = vmatpush2.bf16.msra.mxu0 0
      %499 = vmatprep.subr.bf16.mxu0 0
      %500 = vmatpush2.bf16.msra.mxu0 0
      %501 = vmatprep.mubr.bf16.mxu0 0
      %502 = vmatmul.mubr.bf16.gmra.mxu0 %v413
      %v503 = vpop.f32.mrf.mxu0
      %v504 = vadd.f32 %v395, %v503
      %v505 = vpop.f32.mrf.mxu0
      %v506 = vpop.f32.mrf.mxu0
      %v507 = vadd.f32 %v395, %v506
      %v508 = vpop.f32.mrf.mxu0
      %509 = vmatprep.mubr.bf16.mxu0 0
      %510 = vmatmul.mubr.bf16.gmra.mxu0 %v414
      %v511 = vpop.f32.mrf.mxu0
      %v512 = vadd.f32 %v395, %v511
      %v513 = vpop.f32.mrf.mxu0
      %v514 = vpop.f32.mrf.mxu0
      %v515 = vadd.f32 %v395, %v514
      %v516 = vpop.f32.mrf.mxu0
      %517 = vmatprep.mubr.bf16.mxu0 0
      %518 = vmatmul.mubr.bf16.gmra.mxu0 %v415
      %v519 = vpop.f32.mrf.mxu0
      %v520 = vadd.f32 %v395, %v519
      %v521 = vpop.f32.mrf.mxu0
      %v522 = vpop.f32.mrf.mxu0
      %v523 = vadd.f32 %v395, %v522
      %v524 = vpop.f32.mrf.mxu0
      %525 = vmatprep.mubr.bf16.mxu0 0
      %526 = vmatmul.mubr.bf16.gmra.mxu0 %v416
      %v527 = vpop.f32.mrf.mxu0
      %v528 = vadd.f32 %v395, %v527
      %v529 = vpop.f32.mrf.mxu0
      %v530 = vpop.f32.mrf.mxu0
      %v531 = vadd.f32 %v395, %v530
      %v532 = vpop.f32.mrf.mxu0
      %533 = vdwg.mxu0
      %v534 = vld [vmem:[%s334] sm:$0xf]
      %v535 = vld [vmem:[%s334 + $0x4] sm:$0xf]
      %v536 = vld [vmem:[%s334 + $0x8] sm:$0xf]
      %v537 = vld [vmem:[%s334 + $0xc] sm:$0xf]
      %v538 = vld [vmem:[%s334 + $0x10] sm:$0xf]
      %v539 = vld [vmem:[%s334 + $0x14] sm:$0xf]
      %v540 = vld [vmem:[%s334 + $0x18] sm:$0xf]
      %v541 = vld [vmem:[%s334 + $0x1c] sm:$0xf]
      %v550 = vunpack.c.l.b16 %v534
      %v551 = vunpack.c.l.b16 %v535
      %v552 = vunpack.c.l.b16 %v536
      %v553 = vunpack.c.l.b16 %v537
      %v554 = vunpack.c.l.b16 %v538
      %v555 = vunpack.c.l.b16 %v539
      %v556 = vunpack.c.l.b16 %v540
      %v557 = vunpack.c.l.b16 %v541
      %v558 = vpack.c.b16 %v551, %v550
      %v559 = vpack.c.b16 %v553, %v552
      %v560 = vpack.c.b16 %v555, %v554
      %v561 = vpack.c.b16 %v557, %v556
      %566 = vmatprep.subr.bf16.mxu0 0
      %567 = vmatpush1.bf16.msra.mxu0 %v460
      %568 = vmatprep.subr.bf16.mxu0 0
      %569 = vmatpush1.bf16.msra.mxu0 %v459
      %570 = vmatprep.subr.bf16.mxu0 0
      %571 = vmatpush1.bf16.msra.mxu0 %v458
      %572 = vmatprep.subr.bf16.mxu0 0
      %573 = vmatpush1.bf16.msra.mxu0 %v457
      %574 = vmatprep.subr.bf16.mxu0 0
      %575 = vmatpush1.bf16.msra.mxu0 %v456
      %576 = vmatprep.subr.bf16.mxu0 0
      %577 = vmatpush1.bf16.msra.mxu0 %v455
      %578 = vmatprep.subr.bf16.mxu0 0
      %579 = vmatpush1.bf16.msra.mxu0 %v454
      %580 = vmatprep.subr.bf16.mxu0 0
      %581 = vmatpush1.bf16.msra.mxu0 %v453
      %582 = vmatprep.subr.bf16.mxu0 0
      %583 = vmatpush2.bf16.msra.mxu0 0
      %584 = vmatprep.subr.bf16.mxu0 0
      %585 = vmatpush2.bf16.msra.mxu0 0
      %586 = vmatprep.subr.bf16.mxu0 0
      %587 = vmatpush2.bf16.msra.mxu0 0
      %588 = vmatprep.subr.bf16.mxu0 0
      %589 = vmatpush2.bf16.msra.mxu0 0
      %590 = vmatprep.subr.bf16.mxu0 0
      %591 = vmatpush2.bf16.msra.mxu0 0
      %592 = vmatprep.subr.bf16.mxu0 0
      %593 = vmatpush2.bf16.msra.mxu0 0
      %594 = vmatprep.subr.bf16.mxu0 0
      %595 = vmatpush2.bf16.msra.mxu0 0
      %596 = vmatprep.subr.bf16.mxu0 0
      %597 = vmatpush2.bf16.msra.mxu0 0
      %598 = vmatprep.mubr.bf16.mxu0 0
      %599 = vmatmul.mubr.bf16.gmra.mxu0 %v558
      %v600 = vpop.f32.mrf.mxu0
      %v601 = vadd.f32 %v395, %v600
      %v602 = vpop.f32.mrf.mxu0
      %v603 = vpop.f32.mrf.mxu0
      %v604 = vadd.f32 %v395, %v603
      %v605 = vpop.f32.mrf.mxu0
      %606 = vmatprep.mubr.bf16.mxu0 0
      %607 = vmatmul.mubr.bf16.gmra.mxu0 %v559
      %v608 = vpop.f32.mrf.mxu0
      %v609 = vadd.f32 %v395, %v608
      %v610 = vpop.f32.mrf.mxu0
      %v611 = vpop.f32.mrf.mxu0
      %v612 = vadd.f32 %v395, %v611
      %v613 = vpop.f32.mrf.mxu0
      %614 = vmatprep.mubr.bf16.mxu0 0
      %615 = vmatmul.mubr.bf16.gmra.mxu0 %v560
      %v616 = vpop.f32.mrf.mxu0
      %v617 = vadd.f32 %v395, %v616
      %v618 = vpop.f32.mrf.mxu0
      %v619 = vpop.f32.mrf.mxu0
      %v620 = vadd.f32 %v395, %v619
      %v621 = vpop.f32.mrf.mxu0
      %622 = vmatprep.mubr.bf16.mxu0 0
      %623 = vmatmul.mubr.bf16.gmra.mxu0 %v561
      %v624 = vpop.f32.mrf.mxu0
      %v625 = vadd.f32 %v395, %v624
      %v626 = vpop.f32.mrf.mxu0
      %v627 = vpop.f32.mrf.mxu0
      %v628 = vadd.f32 %v395, %v627
      %v629 = vpop.f32.mrf.mxu0
      %630 = vdwg.mxu0
      %v631 = vmul.f32 %v504, 0.2
      %v632 = vmul.f32 %v507, 0.2
      %v633 = vmul.f32 %v512, 0.2
      %v634 = vmul.f32 %v515, 0.2
      %v635 = vmul.f32 %v520, 0.2
      %v636 = vmul.f32 %v523, 0.2
      %v637 = vmul.f32 %v528, 0.2
      %v638 = vmul.f32 %v531, 0.2
      %v639 = vmax.f32 %v504, %v631
      %v640 = vmax.f32 %v507, %v632
      %v641 = vmax.f32 %v512, %v633
      %v642 = vmax.f32 %v515, %v634
      %v643 = vmax.f32 %v520, %v635
      %v644 = vmax.f32 %v523, %v636
      %v645 = vmax.f32 %v528, %v637
      %v646 = vmax.f32 %v531, %v638
      %v647 = vmul.f32 %v601, 0.2
      %v648 = vmul.f32 %v604, 0.2
      %v649 = vmul.f32 %v609, 0.2
      %v650 = vmul.f32 %v612, 0.2
      %v651 = vmul.f32 %v617, 0.2
      %v652 = vmul.f32 %v620, 0.2
      %v653 = vmul.f32 %v625, 0.2
      %v654 = vmul.f32 %v628, 0.2
      %v655 = vmax.f32 %v601, %v647
      %v656 = vmax.f32 %v604, %v648
      %v657 = vmax.f32 %v609, %v649
      %v658 = vmax.f32 %v612, %v650
      %v659 = vmax.f32 %v617, %v651
      %v660 = vmax.f32 %v620, %v652
      %v661 = vmax.f32 %v625, %v653
      %v662 = vmax.f32 %v628, %v654
      %v663 = vpack.c.bf16 %v640, %v639
      %v664 = vpack.c.bf16 %v642, %v641
      %v665 = vpack.c.bf16 %v644, %v643
      %v666 = vpack.c.bf16 %v646, %v645
      %v671 = vunpack.c.l.b16 %v663
      %v672 = vunpack.c.h.b16 %v663
      %v673 = vunpack.c.l.b16 %v664
      %v674 = vunpack.c.h.b16 %v664
      %v675 = vunpack.c.l.b16 %v665
      %v676 = vunpack.c.h.b16 %v665
      %v677 = vunpack.c.l.b16 %v666
      %v678 = vunpack.c.h.b16 %v666
      %v679 = vpack.c.b16 %v671, %v671
      %v680 = vpack.c.b16 %v672, %v672
      %v681 = vpack.c.b16 %v673, %v673
      %v682 = vpack.c.b16 %v674, %v674
      %v683 = vpack.c.b16 %v675, %v675
      %v684 = vpack.c.b16 %v676, %v676
      %v685 = vpack.c.b16 %v677, %v677
      %v686 = vpack.c.b16 %v678, %v678
      %695 = vst [vmem:[%s344] sm:$0xf] %v679
      %696 = vst [vmem:[%s344 + $0x4] sm:$0xf] %v680
      %697 = vst [vmem:[%s344 + $0x8] sm:$0xf] %v681
      %698 = vst [vmem:[%s344 + $0xc] sm:$0xf] %v682
      %699 = vst [vmem:[%s344 + $0x10] sm:$0xf] %v683
      %700 = vst [vmem:[%s344 + $0x14] sm:$0xf] %v684
      %701 = vst [vmem:[%s344 + $0x18] sm:$0xf] %v685
      %702 = vst [vmem:[%s344 + $0x1c] sm:$0xf] %v686
      %v703 = vpack.c.bf16 %v656, %v655
      %v704 = vpack.c.bf16 %v658, %v657
      %v705 = vpack.c.bf16 %v660, %v659
      %v706 = vpack.c.bf16 %v662, %v661
      %v711 = vunpack.c.l.b16 %v703
      %v712 = vunpack.c.h.b16 %v703
      %v713 = vunpack.c.l.b16 %v704
      %v714 = vunpack.c.h.b16 %v704
      %v715 = vunpack.c.l.b16 %v705
      %v716 = vunpack.c.h.b16 %v705
      %v717 = vunpack.c.l.b16 %v706
      %v718 = vunpack.c.h.b16 %v706
      %v719 = vpack.c.b16 %v711, %v711
      %v720 = vpack.c.b16 %v712, %v712
      %v721 = vpack.c.b16 %v713, %v713
      %v722 = vpack.c.b16 %v714, %v714
      %v723 = vpack.c.b16 %v715, %v715
      %v724 = vpack.c.b16 %v716, %v716
      %v725 = vpack.c.b16 %v717, %v717
      %v726 = vpack.c.b16 %v718, %v718
      %735 = vst [vmem:[%s354] sm:$0xf] %v719
      %736 = vst [vmem:[%s354 + $0x4] sm:$0xf] %v720
      %737 = vst [vmem:[%s354 + $0x8] sm:$0xf] %v721
      %738 = vst [vmem:[%s354 + $0xc] sm:$0xf] %v722
      %739 = vst [vmem:[%s354 + $0x10] sm:$0xf] %v723
      %740 = vst [vmem:[%s354 + $0x14] sm:$0xf] %v724
      %741 = vst [vmem:[%s354 + $0x18] sm:$0xf] %v725
      %742 = vst [vmem:[%s354 + $0x1c] sm:$0xf] %v726
      %v743 = vsub.f32 %v639, %v655
      %v744 = vsub.f32 %v640, %v656
      %v745 = vsub.f32 %v641, %v657
      %v746 = vsub.f32 %v642, %v658
      %v747 = vsub.f32 %v643, %v659
      %v748 = vsub.f32 %v644, %v660
      %v749 = vsub.f32 %v645, %v661
      %v750 = vsub.f32 %v646, %v662
      %v751 = vmul.f32 %v743, %v743
      %v752 = vmul.f32 %v744, %v744
      %v753 = vmul.f32 %v745, %v745
      %v754 = vmul.f32 %v746, %v746
      %v755 = vmul.f32 %v747, %v747
      %v756 = vmul.f32 %v748, %v748
      %v757 = vmul.f32 %v749, %v749
      %v758 = vmul.f32 %v750, %v750
      %759 = vadd.xlane.f32.xlu0 %v751
      %v760 = vpop.xlane.xlu0 %759
      %761 = vadd.xlane.f32.xlu0 %v752
      %v762 = vpop.xlane.xlu0 %761
      %763 = vadd.xlane.f32.xlu0 %v753
      %v764 = vpop.xlane.xlu0 %763
      %765 = vadd.xlane.f32.xlu0 %v754
      %v766 = vpop.xlane.xlu0 %765
      %767 = vadd.xlane.f32.xlu0 %v755
      %v768 = vpop.xlane.xlu0 %767
      %769 = vadd.xlane.f32.xlu0 %v756
      %v770 = vpop.xlane.xlu0 %769
      %771 = vadd.xlane.f32.xlu0 %v757
      %v772 = vpop.xlane.xlu0 %771
      %773 = vadd.xlane.f32.xlu0 %v758
      %v774 = vpop.xlane.xlu0 %773
      %v775 = vadd.f32 %v760, %v762
      %v776 = vadd.f32 %v775, %v764
      %v777 = vadd.f32 %v776, %v766
      %v778 = vadd.f32 %v777, %v768
      %v779 = vadd.f32 %v778, %v770
      %v780 = vadd.f32 %v779, %v772
      %v781 = vadd.f32 %v780, %v774
      %v782 = vrot.slane %v781, 4
      %v783 = vadd.f32 %v781, %v782
      %v784 = vrot.slane %v783, 2
      %v785 = vadd.f32 %v783, %v784
      %v786 = vrot.slane %v785, 1
      %v787 = vadd.f32 %v785, %v786
      %v788 = vld [vmem:[%s358] sm:$0x1]
      %v789 = vadd.f32 %v788, %v787
      %vm790 = vcmask 0
      %791 = vst.msk [vmem:[%s358] sm:$0x1] %vm790, %v789
      // Predicated region
      $region41: #{discriminator_perceptual_loss.3} parent=35 // pred_check
        %p792 = pneg %p360
      $region42: #{discriminator_perceptual_loss.3} parent=35 // pred_check_branch
        %794 = sbr.rel (%p792) target = $region44
      $region43: #{discriminator_perceptual_loss.3} parent=35 // pred_region
        %v795 = vld [vmem:[%s358] sm:$0x1]
        %v796 = vmul.f32 %v795, 0.001953125
        %797 = vst.msk [vmem:[%s358] sm:$0x1] %vm790, %v796
      $region44: #{discriminator_perceptual_loss.3} parent=35 // pred_fallthru
        _
      %s798 = smul.u32 8, %s23
      %p799 = scmp.lt.s32.totalorder %s22, 1
      %s800 = scalar_select %p799, %s22, 1
      %p801 = scmp.lt.s32.totalorder %s798, 7
      %s802 = scalar_select %p801, %s798, 7
      %s803 = smul.addr %s800, 8
      %s804 = sadd.s32 %s802, %s803
      %s805 = smul.addr %s804, 4
      %s806 = scalar_lea.vmem %s4, %s805
      %s807 = smul.u32 8, %s23
      %p808 = scmp.lt.s32.totalorder %s22, 1
      %s809 = scalar_select %p808, %s22, 1
      %p810 = scmp.lt.s32.totalorder %s807, 7
      %s811 = scalar_select %p810, %s807, 7
      %s812 = smul.addr %s809, 8
      %s813 = sadd.s32 %s811, %s812
      %s814 = smul.addr %s813, 4
      %s815 = scalar_lea.vmem %s5, %s814
      %p816 = scmp.lt.s32.totalorder %s22, 1
      %s817 = scalar_select %p816, %s22, 1
      %s818 = scalar_lea.vmem %s6, %s817
      // Predicated region
      $region45: #{discriminator_perceptual_loss.3} parent=35 // pred_check
        %p819 = pneg %p148
      $region46: #{discriminator_perceptual_loss.3} parent=35 // pred_check_branch
        %821 = sbr.rel (%p819) target = $region48
      $region47: #{discriminator_perceptual_loss.3} parent=35 // pred_region
        %s822 = smul.u32 8, %s23
      $region48: #{discriminator_perceptual_loss.3} parent=35 // pred_fallthru
        _
      // Predicated region
      $region49: #{discriminator_perceptual_loss.3} parent=35 // pred_check
        %p823 = pneg %p176
      $region50: #{discriminator_perceptual_loss.3} parent=35 // pred_check_branch
        %825 = sbr.rel (%p823) target = $region52
      $region51: #{discriminator_perceptual_loss.3} parent=35 // pred_region
        %s826 = smul.u32 8, %s23
      $region52: #{discriminator_perceptual_loss.3} parent=35 // pred_fallthru
        _
      // Predicated region
      $region53: #{discriminator_perceptual_loss.3} parent=35 // pred_check
        %p827 = pneg %p202
      $region54: #{discriminator_perceptual_loss.3} parent=35 // pred_check_branch
        %829 = sbr.rel (%p827) target = $region56
      $region55: #{discriminator_perceptual_loss.3} parent=35 // pred_region
        _
      $region56: #{discriminator_perceptual_loss.3} parent=35 // pred_fallthru
        _
    $region36: #{discriminator_perceptual_loss.3} parent=5 // pred_fallthru
      _
    %p830 = scmp.le.s32.totalorder 2, %s13
    // Predicated region
    $region57: #{discriminator_perceptual_loss.3} parent=5 // pred_check
      %p831 = pneg %p830
    $region58: #{discriminator_perceptual_loss.3} parent=5 // pred_check_branch
      %833 = sbr.rel (%p831) target = $region60
    $region59: #{discriminator_perceptual_loss.3} parent=5 // pred_region
      %s834 = ssub.s32 %s13, 2
      // Predicated region
      $region61: #{discriminator_perceptual_loss.3} parent=59 // pred_check
        %p835 = pneg %p154
      $region62: #{discriminator_perceptual_loss.3} parent=59 // pred_check_branch
        %837 = sbr.rel (%p835) target = $region64
      $region63: #{discriminator_perceptual_loss.3} parent=59 // pred_region
        %s838 = smul.u32 8, %s25
        %p839 = scmp.lt.s32.totalorder %s24, 1
        %s840 = scalar_select %p839, %s24, 1
        %p841 = scmp.lt.s32.totalorder %s838, 7
        %s842 = scalar_select %p841, %s838, 7
        %s843 = smul.addr %s840, 8
        %s844 = sadd.s32 %s842, %s843
        %s845 = smul.addr %s844, 4
        %s846 = scalar_lea.vmem %s4, %s845
      $region64: #{discriminator_perceptual_loss.3} parent=59 // pred_fallthru
        _
      // Predicated region
      $region65: #{discriminator_perceptual_loss.3} parent=59 // pred_check
        %p847 = pneg %p182
      $region66: #{discriminator_perceptual_loss.3} parent=59 // pred_check_branch
        %849 = sbr.rel (%p847) target = $region68
      $region67: #{discriminator_perceptual_loss.3} parent=59 // pred_region
        %s850 = smul.u32 8, %s25
        %p851 = scmp.lt.s32.totalorder %s24, 1
        %s852 = scalar_select %p851, %s24, 1
        %p853 = scmp.lt.s32.totalorder %s850, 7
        %s854 = scalar_select %p853, %s850, 7
        %s855 = smul.addr %s852, 8
        %s856 = sadd.s32 %s854, %s855
        %s857 = smul.addr %s856, 4
        %s858 = scalar_lea.vmem %s5, %s857
      $region68: #{discriminator_perceptual_loss.3} parent=59 // pred_fallthru
        _
      // Predicated region
      $region69: #{discriminator_perceptual_loss.3} parent=59 // pred_check
        %p859 = pneg %p208
      $region70: #{discriminator_perceptual_loss.3} parent=59 // pred_check_branch
        %861 = sbr.rel (%p859) target = $region72
      $region71: #{discriminator_perceptual_loss.3} parent=59 // pred_region
        %p862 = scmp.lt.s32.totalorder %s24, 1
        %s863 = scalar_select %p862, %s24, 1
        %s864 = scalar_lea.vmem %s6, %s863
      $region72: #{discriminator_perceptual_loss.3} parent=59 // pred_fallthru
        _
    $region60: #{discriminator_perceptual_loss.3} parent=5 // pred_fallthru
      _
  $region6: #{discriminator_perceptual_loss.3} parent=0 // loop_footer
    %s17 = sadd.s32 1, %s13
  $region7: #{discriminator_perceptual_loss.3} parent=0 // loop_footer_branch
    %12 = sbr.rel target = $region3
  $region8: #{discriminator_perceptual_loss.3} parent=0 // loop_exit
    _

// kernel: discriminator_perceptual_loss.4
$region0: #{discriminator_perceptual_loss.4}
  #allocation0 [shape = 'u32[]', space=smem, size = 0x4, offset = 0x4, fixed_abs, tag = 'smem constant byte address 0x4 - core index']
  #allocation1 [shape = 'u32[144,128]{1,0:T(1,128)}', space=vmem, size = 0x12000, scoped, tag = 'internal scratch']
  %s0 = inlined_call_operand.vmem [shape: bf16[2,16,128], index: 0, kind: input, shape index: {}]
  %s1 = inlined_call_operand.vmem [shape: bf16[2,16,128], index: 1, kind: input, shape index: {}]
  %s2 = inlined_call_operand.vmem [shape: bf16[128,128], index: 2, kind: input, shape index: {}]
  %s3 = inlined_call_operand.vmem [shape: f32[1,128], index: 3, kind: input, shape index: {}]
  %s4 = inlined_call_operand.vmem [shape: bf16[2,16,128], index: 4, kind: output, shape index: {0}]
  %s5 = inlined_call_operand.vmem [shape: bf16[2,16,128], index: 5, kind: output, shape index: {1}]
  %s6 = inlined_call_operand.vmem [shape: f32[2,1,1], index: 6, kind: output, shape index: {2}]
  %7 = xla_tuple %s4, %s5, %s6
  %s8 = sld [smem:[#allocation0]]
  $region73: #{discriminator_perceptual_loss.4} parent=0
    _
  %s10 = ssub.s32 1, %s8
  %s11 = scalar_select 0, %s10, %s8
  loop: start=0, step=1, limit=4
  $region2: #{discriminator_perceptual_loss.4} parent=0 // loop_pre_header
    _
  $region3: #{discriminator_perceptual_loss.4} parent=0 // loop_header
    %s13 = sphi 0, %s17
    %p14 = scmp.ge.s32.totalorder %s13, 4
    %s20 = sphi 0, %s32
    %s21 = sphi 0, %s28
    %s22 = sphi 0, %s20
    %s23 = sphi 0, %s21
    %s24 = sphi 0, %s22
    %s25 = sphi 0, %s23
    %s37 = sphi 0, %s39
    %s40 = sphi 0, %s37
    %s41 = sphi 0, %s40
    %s57 = sphi 0, %s41
    %s65 = sphi 0, %s67
    %s68 = sphi 0, %s65
    %s69 = sphi 0, %s68
    %s85 = sphi 0, %s69
    %s89 = sphi 0, %s89
    %s91 = sphi 0, %s89
    %s92 = sphi 0, %s91
    %s106 = sphi 0, %s92
    %s110 = sphi 0, %s110
    %s112 = sphi 0, %s110
    %s113 = sphi 0, %s112
    %s127 = sphi 0, %s113
    %s135 = sphi 0, %s137
    %s138 = sphi 0, %s135
    %s139 = sphi 0, %s138
    %s155 = sphi 0, %s139
    %s163 = sphi 0, %s165
    %s166 = sphi 0, %s163
    %s167 = sphi 0, %s166
    %s183 = sphi 0, %s167
    %s189 = sphi 0, %s191
    %s192 = sphi 0, %s189
    %s193 = sphi 0, %s192
    %s209 = sphi 0, %s193
  $region4: #{discriminator_perceptual_loss.4} parent=0 // loop_header_branch
    %16 = sbr.rel (%p14) target = $region8
  $region5: #{discriminator_perceptual_loss.4} parent=0 // loop_body
    %s18 = ssub.s32 %s13, 1
    %s19 = ssub.s32 %s13, 2
    %s26 = sadd.s32 1, %s21
    %p27 = scmp.ge.s32.totalorder %s26, 1
    %s28 = scalar_select %p27, 0, %s26
    %s29 = sadd.s32 1, %s20
    %s30 = scalar_select %p27, %s29, %s20
    %p31 = scmp.ge.s32.totalorder %s30, 2
    %s32 = scalar_select %p31, 0, %s30
    %s33 = ssub.s32 %s20, %s32
    %s34 = ssub.s32 %s21, %s28
    %s35 = sor.u32 %s33, %s34
    %p36 = scmp.eq.s32.totalorder %s35, 0
    %s38 = sadd.s32 %s37, 1
    %s39 = scalar_select %p36, %s37, %s38
    %p42 = pneg %p36
    %p43 = scmp.eq.s32.totalorder %s13, 1
    %p44 = por %p42, %p43
    %p45 = scmp.ne.s32.totalorder %s37, %s40
    %p46 = scmp.eq.s32.totalorder %s13, 0
    %p47 = por %p45, %p46
    %p48 = scmp.ne.s32.totalorder %s37, %s40
    %p49 = scmp.eq.s32.totalorder %s18, 1
    %p50 = por %p48, %p49
    %p51 = scmp.ne.s32.totalorder %s40, %s41
    %p52 = scmp.eq.s32.totalorder %s18, 0
    %p53 = por %p51, %p52
    %p54 = scmp.ne.s32.totalorder %s40, %s41
    %p55 = scmp.eq.s32.totalorder %s19, 1
    %p56 = por %p54, %p55
    %p58 = scmp.ne.s32.totalorder %s41, %s57
    %p59 = scmp.eq.s32.totalorder %s19, 0
    %p60 = por %p58, %p59
    %s61 = ssub.s32 %s20, %s32
    %s62 = ssub.s32 %s21, %s28
    %s63 = sor.u32 %s61, %s62
    %p64 = scmp.eq.s32.totalorder %s63, 0
    %s66 = sadd.s32 %s65, 1
    %s67 = scalar_select %p64, %s65, %s66
    %p70 = pneg %p64
    %p71 = scmp.eq.s32.totalorder %s13, 1
    %p72 = por %p70, %p71
    %p73 = scmp.ne.s32.totalorder %s65, %s68
    %p74 = scmp.eq.s32.totalorder %s13, 0
    %p75 = por %p73, %p74
    %p76 = scmp.ne.s32.totalorder %s65, %s68
    %p77 = scmp.eq.s32.totalorder %s18, 1
    %p78 = por %p76, %p77
    %p79 = scmp.ne.s32.totalorder %s68, %s69
    %p80 = scmp.eq.s32.totalorder %s18, 0
    %p81 = por %p79, %p80
    %p82 = scmp.ne.s32.totalorder %s68, %s69
    %p83 = scmp.eq.s32.totalorder %s19, 1
    %p84 = por %p82, %p83
    %p86 = scmp.ne.s32.totalorder %s69, %s85
    %p87 = scmp.eq.s32.totalorder %s19, 0
    %p88 = por %p86, %p87
    %s90 = sadd.s32 %s89, 1
    %p93 = scmp.eq.s32.totalorder %s13, 1
    %p94 = scmp.ne.s32.totalorder %s89, %s91
    %p95 = scmp.eq.s32.totalorder %s13, 0
    %p96 = por %p94, %p95
    %p97 = scmp.ne.s32.totalorder %s89, %s91
    %p98 = scmp.eq.s32.totalorder %s18, 1
    %p99 = por %p97, %p98
    %p100 = scmp.ne.s32.totalorder %s91, %s92
    %p101 = scmp.eq.s32.totalorder %s18, 0
    %p102 = por %p100, %p101
    %p103 = scmp.ne.s32.totalorder %s91, %s92
    %p104 = scmp.eq.s32.totalorder %s19, 1
    %p105 = por %p103, %p104
    %p107 = scmp.ne.s32.totalorder %s92, %s106
    %p108 = scmp.eq.s32.totalorder %s19, 0
    %p109 = por %p107, %p108
    %s111 = sadd.s32 %s110, 1
    %p114 = scmp.eq.s32.totalorder %s13, 1
    %p115 = scmp.ne.s32.totalorder %s110, %s112
    %p116 = scmp.eq.s32.totalorder %s13, 0
    %p117 = por %p115, %p116
    %p118 = scmp.ne.s32.totalorder %s110, %s112
    %p119 = scmp.eq.s32.totalorder %s18, 1
    %p120 = por %p118, %p119
    %p121 = scmp.ne.s32.totalorder %s112, %s113
    %p122 = scmp.eq.s32.totalorder %s18, 0
    %p123 = por %p121, %p122
    %p124 = scmp.ne.s32.totalorder %s112, %s113
    %p125 = scmp.eq.s32.totalorder %s19, 1
    %p126 = por %p124, %p125
    %p128 = scmp.ne.s32.totalorder %s113, %s127
    %p129 = scmp.eq.s32.totalorder %s19, 0
    %p130 = por %p128, %p129
    %s131 = ssub.s32 %s20, %s32
    %s132 = ssub.s32 %s21, %s28
    %s133 = sor.u32 %s131, %s132
    %p134 = scmp.eq.s32.totalorder %s133, 0
    %s136 = sadd.s32 %s135, 1
    %s137 = scalar_select %p134, %s135, %s136
    %p140 = pneg %p134
    %p141 = scmp.eq.s32.totalorder %s13, 1
    %p142 = por %p140, %p141
    %p143 = scmp.ne.s32.totalorder %s135, %s138
    %p144 = scmp.eq.s32.totalorder %s13, 0
    %p145 = por %p143, %p144
    %p146 = scmp.ne.s32.totalorder %s135, %s138
    %p147 = scmp.eq.s32.totalorder %s18, 1
    %p148 = por %p146, %p147
    %p149 = scmp.ne.s32.totalorder %s138, %s139
    %p150 = scmp.eq.s32.totalorder %s18, 0
    %p151 = por %p149, %p150
    %p152 = scmp.ne.s32.totalorder %s138, %s139
    %p153 = scmp.eq.s32.totalorder %s19, 1
    %p154 = por %p152, %p153
    %p156 = scmp.ne.s32.totalorder %s139, %s155
    %p157 = scmp.eq.s32.totalorder %s19, 0
    %p158 = por %p156, %p157
    %s159 = ssub.s32 %s20, %s32
    %s160 = ssub.s32 %s21, %s28
    %s161 = sor.u32 %s159, %s160
    %p162 = scmp.eq.s32.totalorder %s161, 0
    %s164 = sadd.s32 %s163, 1
    %s165 = scalar_select %p162, %s163, %s164
    %p168 = pneg %p162
    %p169 = scmp.eq.s32.totalorder %s13, 1
    %p170 = por %p168, %p169
    %p171 = scmp.ne.s32.totalorder %s163, %s166
    %p172 = scmp.eq.s32.totalorder %s13, 0
    %p173 = por %p171, %p172
    %p174 = scmp.ne.s32.totalorder %s163, %s166
    %p175 = scmp.eq.s32.totalorder %s18, 1
    %p176 = por %p174, %p175
    %p177 = scmp.ne.s32.totalorder %s166, %s167
    %p178 = scmp.eq.s32.totalorder %s18, 0
    %p179 = por %p177, %p178
    %p180 = scmp.ne.s32.totalorder %s166, %s167
    %p181 = scmp.eq.s32.totalorder %s19, 1
    %p182 = por %p180, %p181
    %p184 = scmp.ne.s32.totalorder %s167, %s183
    %p185 = scmp.eq.s32.totalorder %s19, 0
    %p186 = por %p184, %p185
    %s187 = ssub.s32 %s20, %s32
    %p188 = scmp.eq.s32.totalorder %s187, 0
    %s190 = sadd.s32 %s189, 1
    %s191 = scalar_select %p188, %s189, %s190
    %p194 = pneg %p188
    %p195 = scmp.eq.s32.totalorder %s13, 1
    %p196 = por %p194, %p195
    %p197 = scmp.ne.s32.totalorder %s189, %s192
    %p198 = scmp.eq.s32.totalorder %s13, 0
    %p199 = por %p197, %p198
    %p200 = scmp.ne.s32.totalorder %s189, %s192
    %p201 = scmp.eq.s32.totalorder %s18, 1
    %p202 = por %p200, %p201
    %p203 = scmp.ne.s32.totalorder %s192, %s193
    %p204 = scmp.eq.s32.totalorder %s18, 0
    %p205 = por %p203, %p204
    %p206 = scmp.ne.s32.totalorder %s192, %s193
    %p207 = scmp.eq.s32.totalorder %s19, 1
    %p208 = por %p206, %p207
    %p210 = scmp.ne.s32.totalorder %s193, %s209
    %p211 = scmp.eq.s32.totalorder %s19, 0
    %p212 = por %p210, %p211
    %p213 = scmp.le.s32.totalorder 1, %s13
    %p214 = scmp.lt.s32.totalorder %s13, 3
    %p215 = pnand %p213, %p214
    %p216 = pneg %p215
    // Predicated region
    $region9: #{discriminator_perceptual_loss.4} parent=5 // pred_check
      _
    $region10: #{discriminator_perceptual_loss.4} parent=5 // pred_check_branch
      %218 = sbr.rel (%p215) target = $region12
    $region11: #{discriminator_perceptual_loss.4} parent=5 // pred_region
      %s219 = ssub.s32 %s13, 1
      // Predicated region
      $region13: #{discriminator_perceptual_loss.4} parent=11 // pred_check
        %p220 = pneg %p102
      $region14: #{discriminator_perceptual_loss.4} parent=11 // pred_check_branch
        %222 = sbr.rel (%p220) target = $region16
      $region15: #{discriminator_perceptual_loss.4} parent=11 // pred_region
        _
      $region16: #{discriminator_perceptual_loss.4} parent=11 // pred_fallthru
        _
      // Predicated region
      $region17: #{discriminator_perceptual_loss.4} parent=11 // pred_check
        %p223 = pneg %p123
      $region18: #{discriminator_perceptual_loss.4} parent=11 // pred_check_branch
        %225 = sbr.rel (%p223) target = $region20
      $region19: #{discriminator_perceptual_loss.4} parent=11 // pred_region
        _
      $region20: #{discriminator_perceptual_loss.4} parent=11 // pred_fallthru
        _
    $region12: #{discriminator_perceptual_loss.4} parent=5 // pred_fallthru
      _
    %p226 = scmp.lt.s32.totalorder %s13, 2
    // Predicated region
    $region21: #{discriminator_perceptual_loss.4} parent=5 // pred_check
      %p227 = pneg %p226
    $region22: #{discriminator_perceptual_loss.4} parent=5 // pred_check_branch
      %229 = sbr.rel (%p227) target = $region24
    $region23: #{discriminator_perceptual_loss.4} parent=5 // pred_region
      // Predicated region
      $region25: #{discriminator_perceptual_loss.4} parent=23 // pred_check
        %p230 = pneg %p47
      $region26: #{discriminator_perceptual_loss.4} parent=23 // pred_check_branch
        %232 = sbr.rel (%p230) target = $region28
      $region27: #{discriminator_perceptual_loss.4} parent=23 // pred_region
        %s233 = smul.u32 2, %s21
        %p234 = scmp.lt.s32.totalorder %s20, 1
        %s235 = scalar_select %p234, %s20, 1
        %p236 = scmp.lt.s32.totalorder %s233, 1
        %s237 = scalar_select %p236, %s233, 1
        %s238 = smul.addr %s235, 2
        %s239 = sadd.s32 %s237, %s238
        %s240 = smul.addr %s239, 4
        %s241 = scalar_lea.vmem %s0, %s240
        %s242 = smul.u32 2, %s21
      $region28: #{discriminator_perceptual_loss.4} parent=23 // pred_fallthru
        _
      // Predicated region
      $region29: #{discriminator_perceptual_loss.4} parent=23 // pred_check
        %p243 = pneg %p75
      $region30: #{discriminator_perceptual_loss.4} parent=23 // pred_check_branch
        %245 = sbr.rel (%p243) target = $region32
      $region31: #{discriminator_perceptual_loss.4} parent=23 // pred_region
        %s246 = smul.u32 2, %s21
        %p247 = scmp.lt.s32.totalorder %s20, 1
        %s248 = scalar_select %p247, %s20, 1
        %p249 = scmp.lt.s32.totalorder %s246, 1
        %s250 = scalar_select %p249, %s246, 1
        %s251 = smul.addr %s248, 2
        %s252 = sadd.s32 %s250, %s251
        %s253 = smul.addr %s252, 4
        %s254 = scalar_lea.vmem %s1, %s253
        %s255 = smul.u32 2, %s21
      $region32: #{discriminator_perceptual_loss.4} parent=23 // pred_fallthru
        _
    $region24: #{discriminator_perceptual_loss.4} parent=5 // pred_fallthru
      _
    %p256 = scmp.le.s32.totalorder 1, %s13
    %p257 = scmp.lt.s32.totalorder %s13, 3
    %p258 = pnand %p256, %p257
    %p259 = pneg %p258
    // Predicated region
    $region33: #{discriminator_perceptual_loss.4} parent=5 // pred_check
      _
    $region34: #{discriminator_perceptual_loss.4} parent=5 // pred_check_branch
      %261 = sbr.rel (%p258) target = $region36
    $region35: #{discriminator_perceptual_loss.4} parent=5 // pred_region
      %s262 = ssub.s32 %s13, 1
      %s263 = smul.u32 2, %s23
      %p264 = scmp.lt.s32.totalorder %s22, 1
      %s265 = scalar_select %p264, %s22, 1
      %p266 = scmp.lt.s32.totalorder %s263, 1
      %s267 = scalar_select %p266, %s263, 1
      %s268 = smul.addr %s265, 2
      %s269 = sadd.s32 %s267, %s268
      %s270 = smul.addr %s269, 4
      %s271 = scalar_lea.vmem %s0, %s270
      %p272 = pneg %p53
      %p273 = pneg %p50
      %s274 = smul.u32 2, %s23
      %p275 = scmp.lt.s32.totalorder %s22, 1
      %s276 = scalar_select %p275, %s22, 1
      %p277 = scmp.lt.s32.totalorder %s274, 1
      %s278 = scalar_select %p277, %s274, 1
      %s279 = smul.addr %s276, 2
      %s280 = sadd.s32 %s278, %s279
      %s281 = smul.addr %s280, 4
      %s282 = scalar_lea.vmem %s1, %s281
      %p283 = pneg %p81
      %p284 = pneg %p78
      %p285 = pneg %p102
      %p286 = pneg %p99
      %p287 = pneg %p123
      %p288 = pneg %p120
      %p289 = pneg %p151
      %p290 = pneg %p148
      %s291 = smul.u32 2, %s23
      %p292 = scmp.lt.s32.totalorder %s22, 1
      %s293 = scalar_select %p292, %s22, 1
      %p294 = scmp.lt.s32.totalorder %s291, 1
      %s295 = scalar_select %p294, %s291, 1
      %s296 = smul.addr %s293, 2
      %s297 = sadd.s32 %s295, %s296
      %s298 = smul.addr %s297, 4
      %s299 = scalar_lea.vmem %s4, %s298
      %p300 = pneg %p179
      %p301 = pneg %p176
      %s302 = smul.u32 2, %s23
      %p303 = scmp.lt.s32.totalorder %s22, 1
      %s304 = scalar_select %p303, %s22, 1
      %p305 = scmp.lt.s32.totalorder %s302, 1
      %s306 = scalar_select %p305, %s302, 1
      %s307 = smul.addr %s304, 2
      %s308 = sadd.s32 %s306, %s307
      %s309 = smul.addr %s308, 4
      %s310 = scalar_lea.vmem %s5, %s309
      %p311 = pneg %p205
      %p312 = pneg %p202
      %p313 = scmp.lt.s32.totalorder %s22, 1
      %s314 = scalar_select %p313, %s22, 1
      %s315 = scalar_lea.vmem %s6, %s314
      %s316 = smul.u32 2, %s23
      %p317 = scmp.lt.s32.totalorder %s22, 1
      %s318 = scalar_select %p317, %s22, 1
      %p319 = scmp.lt.s32.totalorder %s316, 1
      %s320 = scalar_select %p319, %s316, 1
      %s321 = smul.addr %s318, 2
      %s322 = sadd.s32 %s320, %s321
      %s323 = smul.addr %s322, 4
      %s324 = scalar_lea.vmem %s0, %s323
      %s325 = smul.u32 2, %s23
      %s326 = smul.u32 2, %s23
      %p327 = scmp.lt.s32.totalorder %s22, 1
      %s328 = scalar_select %p327, %s22, 1
      %p329 = scmp.lt.s32.totalorder %s326, 1
      %s330 = scalar_select %p329, %s326, 1
      %s331 = smul.addr %s328, 2
      %s332 = sadd.s32 %s330, %s331
      %s333 = smul.addr %s332, 4
      %s334 = scalar_lea.vmem %s1, %s333
      %s335 = smul.u32 2, %s23
      %s336 = smul.u32 2, %s23
      %p337 = scmp.lt.s32.totalorder %s22, 1
      %s338 = scalar_select %p337, %s22, 1
      %p339 = scmp.lt.s32.totalorder %s336, 1
      %s340 = scalar_select %p339, %s336, 1
      %s341 = smul.addr %s338, 2
      %s342 = sadd.s32 %s340, %s341
      %s343 = smul.addr %s342, 4
      %s344 = scalar_lea.vmem %s4, %s343
      %s345 = smul.u32 2, %s23
      %s346 = smul.u32 2, %s23
      %p347 = scmp.lt.s32.totalorder %s22, 1
      %s348 = scalar_select %p347, %s22, 1
      %p349 = scmp.lt.s32.totalorder %s346, 1
      %s350 = scalar_select %p349, %s346, 1
      %s351 = smul.addr %s348, 2
      %s352 = sadd.s32 %s350, %s351
      %s353 = smul.addr %s352, 4
      %s354 = scalar_lea.vmem %s5, %s353
      %s355 = smul.u32 2, %s23
      %p356 = scmp.lt.s32.totalorder %s22, 1
      %s357 = scalar_select %p356, %s22, 1
      %s358 = scalar_lea.vmem %s6, %s357
      %p360 = scmp.eq.s32.totalorder %s23, 0
      // Predicated region
      $region37: #{discriminator_perceptual_loss.4} parent=35 // pred_check
        %p361 = pneg %p360
      $region38: #{discriminator_perceptual_loss.4} parent=35 // pred_check_branch
        %363 = sbr.rel (%p361) target = $region40
      $region39: #{discriminator_perceptual_loss.4} parent=35 // pred_region
        %vm364 = vcmask 0
        %365 = vst.msk [vmem:[%s358] sm:$0x1] %vm364, 0.0
      $region40: #{discriminator_perceptual_loss.4} parent=35 // pred_fallthru
        _
      %v366 = vld [vmem:[%s2] sm:$0xf]
      %v367 = vld [vmem:[%s2 + $0x4] sm:$0xf]
      %v368 = vld [vmem:[%s2 + $0x8] sm:$0xf]
      %v369 = vld [vmem:[%s2 + $0xc] sm:$0xf]
      %v370 = vld [vmem:[%s2 + $0x10] sm:$0xf]
      %v371 = vld [vmem:[%s2 + $0x14] sm:$0xf]
      %v372 = vld [vmem:[%s2 + $0x18] sm:$0xf]
      %v373 = vld [vmem:[%s2 + $0x1c] sm:$0xf]
      %v374 = vld [vmem:[%s2 + $0x20] sm:$0xf]
      %v375 = vld [vmem:[%s2 + $0x24] sm:$0xf]
      %v376 = vld [vmem:[%s2 + $0x28] sm:$0xf]
      %v377 = vld [vmem:[%s2 + $0x2c] sm:$0xf]
      %v378 = vld [vmem:[%s2 + $0x30] sm:$0xf]
      %v379 = vld [vmem:[%s2 + $0x34] sm:$0xf]
      %v380 = vld [vmem:[%s2 + $0x38] sm:$0xf]
      %v381 = vld [vmem:[%s2 + $0x3c] sm:$0xf]
      %v382 = vld [vmem:[%s3] sm:$0x1]
      %v383 = vld [vmem:[%s324] sm:$0xf]
      %v384 = vld [vmem:[%s324 + $0x4] sm:$0xf]
      %v386 = vlaneseq
      %v387 = vshrl.u32 %v386, 7
      %v388 = vsub.s32 0, %v387
      %v389 = vrot.slane %v382, %v388
      %v393 = vunpack.c.l.b16 %v383
      %v394 = vunpack.c.l.b16 %v384
      %v395 = vpack.c.b16 %v394, %v393
      %v413 = vunpack.c.l.b16 %v366
      %v414 = vunpack.c.l.b16 %v367
      %v415 = vunpack.c.l.b16 %v368
      %v416 = vunpack.c.l.b16 %v369
      %v417 = vunpack.c.l.b16 %v370
      %v418 = vunpack.c.l.b16 %v371
      %v419 = vunpack.c.l.b16 %v372
      %v420 = vunpack.c.l.b16 %v373
      %v421 = vunpack.c.l.b16 %v374
      %v422 = vunpack.c.l.b16 %v375
      %v423 = vunpack.c.l.b16 %v376
      %v424 = vunpack.c.l.b16 %v377
      %v425 = vunpack.c.l.b16 %v378
      %v426 = vunpack.c.l.b16 %v379
      %v427 = vunpack.c.l.b16 %v380
      %v428 = vunpack.c.l.b16 %v381
      %v429 = vpack.c.b16 %v414, %v413
      %v430 = vpack.c.b16 %v416, %v415
      %v431 = vpack.c.b16 %v418, %v417
      %v432 = vpack.c.b16 %v420, %v419
      %v433 = vpack.c.b16 %v422, %v421
      %v434 = vpack.c.b16 %v424, %v423
      %v435 = vpack.c.b16 %v426, %v425
      %v436 = vpack.c.b16 %v428, %v427
      %445 = vmatprep.subr.bf16.mxu0 0
      %446 = vmatpush1.bf16.msra.mxu0 %v436
      %447 = vmatprep.subr.bf16.mxu0 0
      %448 = vmatpush1.bf16.msra.mxu0 %v435
      %449 = vmatprep.subr.bf16.mxu0 0
      %450 = vmatpush1.bf16.msra.mxu0 %v434
      %451 = vmatprep.subr.bf16.mxu0 0
      %452 = vmatpush1.bf16.msra.mxu0 %v433
      %453 = vmatprep.subr.bf16.mxu0 0
      %454 = vmatpush1.bf16.msra.mxu0 %v432
      %455 = vmatprep.subr.bf16.mxu0 0
      %456 = vmatpush1.bf16.msra.mxu0 %v431
      %457 = vmatprep.subr.bf16.mxu0 0
      %458 = vmatpush1.bf16.msra.mxu0 %v430
      %459 = vmatprep.subr.bf16.mxu0 0
      %460 = vmatpush1.bf16.msra.mxu0 %v429
      %461 = vmatprep.subr.bf16.mxu0 0
      %462 = vmatpush2.bf16.msra.mxu0 0
      %463 = vmatprep.subr.bf16.mxu0 0
      %464 = vmatpush2.bf16.msra.mxu0 0
      %465 = vmatprep.subr.bf16.mxu0 0
      %466 = vmatpush2.bf16.msra.mxu0 0
      %467 = vmatprep.subr.bf16.mxu0 0
      %468 = vmatpush2.bf16.msra.mxu0 0
      %469 = vmatprep.subr.bf16.mxu0 0
      %470 = vmatpush2.bf16.msra.mxu0 0
      %471 = vmatprep.subr.bf16.mxu0 0
      %472 = vmatpush2.bf16.msra.mxu0 0
      %473 = vmatprep.subr.bf16.mxu0 0
      %474 = vmatpush2.bf16.msra.mxu0 0
      %475 = vmatprep.subr.bf16.mxu0 0
      %476 = vmatpush2.bf16.msra.mxu0 0
      %477 = vmatprep.mubr.bf16.mxu0 0
      %478 = vmatmul.mubr.bf16.gmra.mxu0 %v395
      %v479 = vpop.f32.mrf.mxu0
      %v480 = vadd.f32 %v389, %v479
      %v481 = vpop.f32.mrf.mxu0
      %v482 = vpop.f32.mrf.mxu0
      %v483 = vadd.f32 %v389, %v482
      %v484 = vpop.f32.mrf.mxu0
      %485 = vdwg.mxu0
      %v486 = vld [vmem:[%s334] sm:$0xf]
      %v487 = vld [vmem:[%s334 + $0x4] sm:$0xf]
      %v490 = vunpack.c.l.b16 %v486
      %v491 = vunpack.c.l.b16 %v487
      %v492 = vpack.c.b16 %v491, %v490
      %494 = vmatprep.subr.bf16.mxu0 0
      %495 = vmatpush1.bf16.msra.mxu0 %v436
      %496 = vmatprep.subr.bf16.mxu0 0
      %497 = vmatpush1.bf16.msra.mxu0 %v435
      %498 = vmatprep.subr.bf16.mxu0 0
      %499 = vmatpush1.bf16.msra.mxu0 %v434
      %500 = vmatprep.subr.bf16.mxu0 0
      %501 = vmatpush1.bf16.msra.mxu0 %v433
      %502 = vmatprep.subr.bf16.mxu0 0
      %503 = vmatpush1.bf16.msra.mxu0 %v432
      %504 = vmatprep.subr.bf16.mxu0 0
      %505 = vmatpush1.bf16.msra.mxu0 %v431
      %506 = vmatprep.subr.bf16.mxu0 0
      %507 = vmatpush1.bf16.msra.mxu0 %v430
      %508 = vmatprep.subr.bf16.mxu0 0
      %509 = vmatpush1.bf16.msra.mxu0 %v429
      %510 = vmatprep.subr.bf16.mxu0 0
      %511 = vmatpush2.bf16.msra.mxu0 0
      %512 = vmatprep.subr.bf16.mxu0 0
      %513 = vmatpush2.bf16.msra.mxu0 0
      %514 = vmatprep.subr.bf16.mxu0 0
      %515 = vmatpush2.bf16.msra.mxu0 0
      %516 = vmatprep.subr.bf16.mxu0 0
      %517 = vmatpush2.bf16.msra.mxu0 0
      %518 = vmatprep.subr.bf16.mxu0 0
      %519 = vmatpush2.bf16.msra.mxu0 0
      %520 = vmatprep.subr.bf16.mxu0 0
      %521 = vmatpush2.bf16.msra.mxu0 0
      %522 = vmatprep.subr.bf16.mxu0 0
      %523 = vmatpush2.bf16.msra.mxu0 0
      %524 = vmatprep.subr.bf16.mxu0 0
      %525 = vmatpush2.bf16.msra.mxu0 0
      %526 = vmatprep.mubr.bf16.mxu0 0
      %527 = vmatmul.mubr.bf16.gmra.mxu0 %v492
      %v528 = vpop.f32.mrf.mxu0
      %v529 = vadd.f32 %v389, %v528
      %v530 = vpop.f32.mrf.mxu0
      %v531 = vpop.f32.mrf.mxu0
      %v532 = vadd.f32 %v389, %v531
      %v533 = vpop.f32.mrf.mxu0
      %534 = vdwg.mxu0
      %v535 = vmul.f32 %v480, 0.2
      %v536 = vmul.f32 %v483, 0.2
      %v537 = vmax.f32 %v480, %v535
      %v538 = vmax.f32 %v483, %v536
      %v539 = vmul.f32 %v529, 0.2
      %v540 = vmul.f32 %v532, 0.2
      %v541 = vmax.f32 %v529, %v539
      %v542 = vmax.f32 %v532, %v540
      %v543 = vpack.c.bf16 %v538, %v537
      %v545 = vunpack.c.l.b16 %v543
      %v546 = vunpack.c.h.b16 %v543
      %v547 = vpack.c.b16 %v545, %v545
      %v548 = vpack.c.b16 %v546, %v546
      %551 = vst [vmem:[%s344] sm:$0xf] %v547
      %552 = vst [vmem:[%s344 + $0x4] sm:$0xf] %v548
      %v553 = vpack.c.bf16 %v542, %v541
      %v555 = vunpack.c.l.b16 %v553
      %v556 = vunpack.c.h.b16 %v553
      %v557 = vpack.c.b16 %v555, %v555
      %v558 = vpack.c.b16 %v556, %v556
      %561 = vst [vmem:[%s354] sm:$0xf] %v557
      %562 = vst [vmem:[%s354 + $0x4] sm:$0xf] %v558
      %v563 = vsub.f32 %v537, %v541
      %v564 = vsub.f32 %v538, %v542
      %v565 = vmul.f32 %v563, %v563
      %v566 = vmul.f32 %v564, %v564
      %567 = vadd.xlane.f32.xlu0 %v565
      %v568 = vpop.xlane.xlu0 %567
      %569 = vadd.xlane.f32.xlu0 %v566
      %v570 = vpop.xlane.xlu0 %569
      %v571 = vadd.f32 %v568, %v570
      %v572 = vrot.slane %v571, 4
      %v573 = vadd.f32 %v571, %v572
      %v574 = vrot.slane %v573, 2
      %v575 = vadd.f32 %v573, %v574
      %v576 = vrot.slane %v575, 1
      %v577 = vadd.f32 %v575, %v576
      %v578 = vld [vmem:[%s358] sm:$0x1]
      %v579 = vadd.f32 %v578, %v577
      %vm580 = vcmask 0
      %581 = vst.msk [vmem:[%s358] sm:$0x1] %vm580, %v579
      // Predicated region
      $region41: #{discriminator_perceptual_loss.4} parent=35 // pred_check
        %p582 = pneg %p360
      $region42: #{discriminator_perceptual_loss.4} parent=35 // pred_check_branch
        %584 = sbr.rel (%p582) target = $region44
      $region43: #{discriminator_perceptual_loss.4} parent=35 // pred_region
        %v585 = vld [vmem:[%s358] sm:$0x1]
        %v586 = vmul.f32 %v585, 0.00390625
        %587 = vst.msk [vmem:[%s358] sm:$0x1] %vm580, %v586
      $region44: #{discriminator_perceptual_loss.4} parent=35 // pred_fallthru
        _
      %s588 = smul.u32 2, %s23
      %p589 = scmp.lt.s32.totalorder %s22, 1
      %s590 = scalar_select %p589, %s22, 1
      %p591 = scmp.lt.s32.totalorder %s588, 1
      %s592 = scalar_select %p591, %s588, 1
      %s593 = smul.addr %s590, 2
      %s594 = sadd.s32 %s592, %s593
      %s595 = smul.addr %s594, 4
      %s596 = scalar_lea.vmem %s4, %s595
      %s597 = smul.u32 2, %s23
      %p598 = scmp.lt.s32.totalorder %s22, 1
      %s599 = scalar_select %p598, %s22, 1
      %p600 = scmp.lt.s32.totalorder %s597, 1
      %s601 = scalar_select %p600, %s597, 1
      %s602 = smul.addr %s599, 2
      %s603 = sadd.s32 %s601, %s602
      %s604 = smul.addr %s603, 4
      %s605 = scalar_lea.vmem %s5, %s604
      %p606 = scmp.lt.s32.totalorder %s22, 1
      %s607 = scalar_select %p606, %s22, 1
      %s608 = scalar_lea.vmem %s6, %s607
      // Predicated region
      $region45: #{discriminator_perceptual_loss.4} parent=35 // pred_check
        %p609 = pneg %p148
      $region46: #{discriminator_perceptual_loss.4} parent=35 // pred_check_branch
        %611 = sbr.rel (%p609) target = $region48
      $region47: #{discriminator_perceptual_loss.4} parent=35 // pred_region
        %s612 = smul.u32 2, %s23
      $region48: #{discriminator_perceptual_loss.4} parent=35 // pred_fallthru
        _
      // Predicated region
      $region49: #{discriminator_perceptual_loss.4} parent=35 // pred_check
        %p613 = pneg %p176
      $region50: #{discriminator_perceptual_loss.4} parent=35 // pred_check_branch
        %615 = sbr.rel (%p613) target = $region52
      $region51: #{discriminator_perceptual_loss.4} parent=35 // pred_region
        %s616 = smul.u32 2, %s23
      $region52: #{discriminator_perceptual_loss.4} parent=35 // pred_fallthru
        _
      // Predicated region
      $region53: #{discriminator_perceptual_loss.4} parent=35 // pred_check
        %p617 = pneg %p202
      $region54: #{discriminator_perceptual_loss.4} parent=35 // pred_check_branch
        %619 = sbr.rel (%p617) target = $region56
      $region55: #{discriminator_perceptual_loss.4} parent=35 // pred_region
        _
      $region56: #{discriminator_perceptual_loss.4} parent=35 // pred_fallthru
        _
    $region36: #{discriminator_perceptual_loss.4} parent=5 // pred_fallthru
      _
    %p620 = scmp.le.s32.totalorder 2, %s13
    // Predicated region
    $region57: #{discriminator_perceptual_loss.4} parent=5 // pred_check
      %p621 = pneg %p620
    $region58: #{discriminator_perceptual_loss.4} parent=5 // pred_check_branch
      %623 = sbr.rel (%p621) target = $region60
    $region59: #{discriminator_perceptual_loss.4} parent=5 // pred_region
      %s624 = ssub.s32 %s13, 2
      // Predicated region
      $region61: #{discriminator_perceptual_loss.4} parent=59 // pred_check
        %p625 = pneg %p154
      $region62: #{discriminator_perceptual_loss.4} parent=59 // pred_check_branch
        %627 = sbr.rel (%p625) target = $region64
      $region63: #{discriminator_perceptual_loss.4} parent=59 // pred_region
        %s628 = smul.u32 2, %s25
        %p629 = scmp.lt.s32.totalorder %s24, 1
        %s630 = scalar_select %p629, %s24, 1
        %p631 = scmp.lt.s32.totalorder %s628, 1
        %s632 = scalar_select %p631, %s628, 1
        %s633 = smul.addr %s630, 2
        %s634 = sadd.s32 %s632, %s633
        %s635 = smul.addr %s634, 4
        %s636 = scalar_lea.vmem %s4, %s635
      $region64: #{discriminator_perceptual_loss.4} parent=59 // pred_fallthru
        _
      // Predicated region
      $region65: #{discriminator_perceptual_loss.4} parent=59 // pred_check
        %p637 = pneg %p182
      $region66: #{discriminator_perceptual_loss.4} parent=59 // pred_check_branch
        %639 = sbr.rel (%p637) target = $region68
      $region67: #{discriminator_perceptual_loss.4} parent=59 // pred_region
        %s640 = smul.u32 2, %s25
        %p641 = scmp.lt.s32.totalorder %s24, 1
        %s642 = scalar_select %p641, %s24, 1
        %p643 = scmp.lt.s32.totalorder %s640, 1
        %s644 = scalar_select %p643, %s640, 1
        %s645 = smul.addr %s642, 2
        %s646 = sadd.s32 %s644, %s645
        %s647 = smul.addr %s646, 4
        %s648 = scalar_lea.vmem %s5, %s647
      $region68: #{discriminator_perceptual_loss.4} parent=59 // pred_fallthru
        _
      // Predicated region
      $region69: #{discriminator_perceptual_loss.4} parent=59 // pred_check
        %p649 = pneg %p208
      $region70: #{discriminator_perceptual_loss.4} parent=59 // pred_check_branch
        %651 = sbr.rel (%p649) target = $region72
      $region71: #{discriminator_perceptual_loss.4} parent=59 // pred_region
        %p652 = scmp.lt.s32.totalorder %s24, 1
        %s653 = scalar_select %p652, %s24, 1
        %s654 = scalar_lea.vmem %s6, %s653
      $region72: #{discriminator_perceptual_loss.4} parent=59 // pred_fallthru
        _
    $region60: #{discriminator_perceptual_loss.4} parent=5 // pred_fallthru
      _
  $region6: #{discriminator_perceptual_loss.4} parent=0 // loop_footer
    %s17 = sadd.s32 1, %s13
  $region7: #{discriminator_perceptual_loss.4} parent=0 // loop_footer_branch
    %12 = sbr.rel target = $region3
  $region8: #{discriminator_perceptual_loss.4} parent=0 // loop_exit
    _

// kernel: discriminator_perceptual_loss.5
$region0: #{discriminator_perceptual_loss.5}
  #allocation0 [shape = 'u32[]', space=smem, size = 0x4, offset = 0x4, fixed_abs, tag = 'smem constant byte address 0x4 - core index']
  #allocation1 [shape = 'u32[144,128]{1,0:T(1,128)}', space=vmem, size = 0x12000, scoped, tag = 'internal scratch']
  %s0 = inlined_call_operand.vmem [shape: bf16[2,16,256], index: 0, kind: input, shape index: {}]
  %s1 = inlined_call_operand.vmem [shape: bf16[2,16,256], index: 1, kind: input, shape index: {}]
  %s2 = inlined_call_operand.vmem [shape: bf16[256,128], index: 2, kind: input, shape index: {}]
  %s3 = inlined_call_operand.vmem [shape: f32[1,128], index: 3, kind: input, shape index: {}]
  %s4 = inlined_call_operand.vmem [shape: f32[2,1,1], index: 4, kind: output, shape index: {}]
  %s5 = sld [smem:[#allocation0]]
  $region57: #{discriminator_perceptual_loss.5} parent=0
    _
  %s7 = ssub.s32 1, %s5
  %s8 = scalar_select 0, %s7, %s5
  loop: start=0, step=1, limit=4
  $region2: #{discriminator_perceptual_loss.5} parent=0 // loop_pre_header
    _
  $region3: #{discriminator_perceptual_loss.5} parent=0 // loop_header
    %s10 = sphi 0, %s14
    %p11 = scmp.ge.s32.totalorder %s10, 4
    %s17 = sphi 0, %s29
    %s18 = sphi 0, %s25
    %s19 = sphi 0, %s17
    %s20 = sphi 0, %s18
    %s21 = sphi 0, %s19
    %s22 = sphi 0, %s20
    %s34 = sphi 0, %s36
    %s37 = sphi 0, %s34
    %s38 = sphi 0, %s37
    %s54 = sphi 0, %s38
    %s62 = sphi 0, %s64
    %s65 = sphi 0, %s62
    %s66 = sphi 0, %s65
    %s82 = sphi 0, %s66
    %s86 = sphi 0, %s86
    %s88 = sphi 0, %s86
    %s89 = sphi 0, %s88
    %s103 = sphi 0, %s89
    %s107 = sphi 0, %s107
    %s109 = sphi 0, %s107
    %s110 = sphi 0, %s109
    %s124 = sphi 0, %s110
    %s130 = sphi 0, %s132
    %s133 = sphi 0, %s130
    %s134 = sphi 0, %s133
    %s150 = sphi 0, %s134
  $region4: #{discriminator_perceptual_loss.5} parent=0 // loop_header_branch
    %13 = sbr.rel (%p11) target = $region8
  $region5: #{discriminator_perceptual_loss.5} parent=0 // loop_body
    %s15 = ssub.s32 %s10, 1
    %s16 = ssub.s32 %s10, 2
    %s23 = sadd.s32 1, %s18
    %p24 = scmp.ge.s32.totalorder %s23, 1
    %s25 = scalar_select %p24, 0, %s23
    %s26 = sadd.s32 1, %s17
    %s27 = scalar_select %p24, %s26, %s17
    %p28 = scmp.ge.s32.totalorder %s27, 2
    %s29 = scalar_select %p28, 0, %s27
    %s30 = ssub.s32 %s17, %s29
    %s31 = ssub.s32 %s18, %s25
    %s32 = sor.u32 %s30, %s31
    %p33 = scmp.eq.s32.totalorder %s32, 0
    %s35 = sadd.s32 %s34, 1
    %s36 = scalar_select %p33, %s34, %s35
    %p39 = pneg %p33
    %p40 = scmp.eq.s32.totalorder %s10, 1
    %p41 = por %p39, %p40
    %p42 = scmp.ne.s32.totalorder %s34, %s37
    %p43 = scmp.eq.s32.totalorder %s10, 0
    %p44 = por %p42, %p43
    %p45 = scmp.ne.s32.totalorder %s34, %s37
    %p46 = scmp.eq.s32.totalorder %s15, 1
    %p47 = por %p45, %p46
    %p48 = scmp.ne.s32.totalorder %s37, %s38
    %p49 = scmp.eq.s32.totalorder %s15, 0
    %p50 = por %p48, %p49
    %p51 = scmp.ne.s32.totalorder %s37, %s38
    %p52 = scmp.eq.s32.totalorder %s16, 1
    %p53 = por %p51, %p52
    %p55 = scmp.ne.s32.totalorder %s38, %s54
    %p56 = scmp.eq.s32.totalorder %s16, 0
    %p57 = por %p55, %p56
    %s58 = ssub.s32 %s17, %s29
    %s59 = ssub.s32 %s18, %s25
    %s60 = sor.u32 %s58, %s59
    %p61 = scmp.eq.s32.totalorder %s60, 0
    %s63 = sadd.s32 %s62, 1
    %s64 = scalar_select %p61, %s62, %s63
    %p67 = pneg %p61
    %p68 = scmp.eq.s32.totalorder %s10, 1
    %p69 = por %p67, %p68
    %p70 = scmp.ne.s32.totalorder %s62, %s65
    %p71 = scmp.eq.s32.totalorder %s10, 0
    %p72 = por %p70, %p71
    %p73 = scmp.ne.s32.totalorder %s62, %s65
    %p74 = scmp.eq.s32.totalorder %s15, 1
    %p75 = por %p73, %p74
    %p76 = scmp.ne.s32.totalorder %s65, %s66
    %p77 = scmp.eq.s32.totalorder %s15, 0
    %p78 = por %p76, %p77
    %p79 = scmp.ne.s32.totalorder %s65, %s66
    %p80 = scmp.eq.s32.totalorder %s16, 1
    %p81 = por %p79, %p80
    %p83 = scmp.ne.s32.totalorder %s66, %s82
    %p84 = scmp.eq.s32.totalorder %s16, 0
    %p85 = por %p83, %p84
    %s87 = sadd.s32 %s86, 1
    %p90 = scmp.eq.s32.totalorder %s10, 1
    %p91 = scmp.ne.s32.totalorder %s86, %s88
    %p92 = scmp.eq.s32.totalorder %s10, 0
    %p93 = por %p91, %p92
    %p94 = scmp.ne.s32.totalorder %s86, %s88
    %p95 = scmp.eq.s32.totalorder %s15, 1
    %p96 = por %p94, %p95
    %p97 = scmp.ne.s32.totalorder %s88, %s89
    %p98 = scmp.eq.s32.totalorder %s15, 0
    %p99 = por %p97, %p98
    %p100 = scmp.ne.s32.totalorder %s88, %s89
    %p101 = scmp.eq.s32.totalorder %s16, 1
    %p102 = por %p100, %p101
    %p104 = scmp.ne.s32.totalorder %s89, %s103
    %p105 = scmp.eq.s32.totalorder %s16, 0
    %p106 = por %p104, %p105
    %s108 = sadd.s32 %s107, 1
    %p111 = scmp.eq.s32.totalorder %s10, 1
    %p112 = scmp.ne.s32.totalorder %s107, %s109
    %p113 = scmp.eq.s32.totalorder %s10, 0
    %p114 = por %p112, %p113
    %p115 = scmp.ne.s32.totalorder %s107, %s109
    %p116 = scmp.eq.s32.totalorder %s15, 1
    %p117 = por %p115, %p116
    %p118 = scmp.ne.s32.totalorder %s109, %s110
    %p119 = scmp.eq.s32.totalorder %s15, 0
    %p120 = por %p118, %p119
    %p121 = scmp.ne.s32.totalorder %s109, %s110
    %p122 = scmp.eq.s32.totalorder %s16, 1
    %p123 = por %p121, %p122
    %p125 = scmp.ne.s32.totalorder %s110, %s124
    %p126 = scmp.eq.s32.totalorder %s16, 0
    %p127 = por %p125, %p126
    %s128 = ssub.s32 %s17, %s29
    %p129 = scmp.eq.s32.totalorder %s128, 0
    %s131 = sadd.s32 %s130, 1
    %s132 = scalar_select %p129, %s130, %s131
    %p135 = pneg %p129
    %p136 = scmp.eq.s32.totalorder %s10, 1
    %p137 = por %p135, %p136
    %p138 = scmp.ne.s32.totalorder %s130, %s133
    %p139 = scmp.eq.s32.totalorder %s10, 0
    %p140 = por %p138, %p139
    %p141 = scmp.ne.s32.totalorder %s130, %s133
    %p142 = scmp.eq.s32.totalorder %s15, 1
    %p143 = por %p141, %p142
    %p144 = scmp.ne.s32.totalorder %s133, %s134
    %p145 = scmp.eq.s32.totalorder %s15, 0
    %p146 = por %p144, %p145
    %p147 = scmp.ne.s32.totalorder %s133, %s134
    %p148 = scmp.eq.s32.totalorder %s16, 1
    %p149 = por %p147, %p148
    %p151 = scmp.ne.s32.totalorder %s134, %s150
    %p152 = scmp.eq.s32.totalorder %s16, 0
    %p153 = por %p151, %p152
    %p154 = scmp.le.s32.totalorder 1, %s10
    %p155 = scmp.lt.s32.totalorder %s10, 3
    %p156 = pnand %p154, %p155
    %p157 = pneg %p156
    // Predicated region
    $region9: #{discriminator_perceptual_loss.5} parent=5 // pred_check
      _
    $region10: #{discriminator_perceptual_loss.5} parent=5 // pred_check_branch
      %159 = sbr.rel (%p156) target = $region12
    $region11: #{discriminator_perceptual_loss.5} parent=5 // pred_region
      %s160 = ssub.s32 %s10, 1
      // Predicated region
      $region13: #{discriminator_perceptual_loss.5} parent=11 // pred_check
        %p161 = pneg %p99
      $region14: #{discriminator_perceptual_loss.5} parent=11 // pred_check_branch
        %163 = sbr.rel (%p161) target = $region16
      $region15: #{discriminator_perceptual_loss.5} parent=11 // pred_region
        _
      $region16: #{discriminator_perceptual_loss.5} parent=11 // pred_fallthru
        _
      // Predicated region
      $region17: #{discriminator_perceptual_loss.5} parent=11 // pred_check
        %p164 = pneg %p120
      $region18: #{discriminator_perceptual_loss.5} parent=11 // pred_check_branch
        %166 = sbr.rel (%p164) target = $region20
      $region19: #{discriminator_perceptual_loss.5} parent=11 // pred_region
        _
      $region20: #{discriminator_perceptual_loss.5} parent=11 // pred_fallthru
        _
    $region12: #{discriminator_perceptual_loss.5} parent=5 // pred_fallthru
      _
    %p167 = scmp.lt.s32.totalorder %s10, 2
    // Predicated region
    $region21: #{discriminator_perceptual_loss.5} parent=5 // pred_check
      %p168 = pneg %p167
    $region22: #{discriminator_perceptual_loss.5} parent=5 // pred_check_branch
      %170 = sbr.rel (%p168) target = $region24
    $region23: #{discriminator_perceptual_loss.5} parent=5 // pred_region
      // Predicated region
      $region25: #{discriminator_perceptual_loss.5} parent=23 // pred_check
        %p171 = pneg %p44
      $region26: #{discriminator_perceptual_loss.5} parent=23 // pred_check_branch
        %173 = sbr.rel (%p171) target = $region28
      $region27: #{discriminator_perceptual_loss.5} parent=23 // pred_region
        %s174 = smul.u32 2, %s18
        %p175 = scmp.lt.s32.totalorder %s17, 1
        %s176 = scalar_select %p175, %s17, 1
        %p177 = scmp.lt.s32.totalorder %s174, 1
        %s178 = scalar_select %p177, %s174, 1
        %s179 = smul.addr %s178, 2
        %s180 = smul.addr %s176, 4
        %s181 = sadd.s32 %s179, %s180
        %s182 = smul.addr %s181, 4
        %s183 = scalar_lea.vmem %s0, %s182
        %s184 = smul.u32 2, %s18
      $region28: #{discriminator_perceptual_loss.5} parent=23 // pred_fallthru
        _
      // Predicated region
      $region29: #{discriminator_perceptual_loss.5} parent=23 // pred_check
        %p185 = pneg %p72
      $region30: #{discriminator_perceptual_loss.5} parent=23 // pred_check_branch
        %187 = sbr.rel (%p185) target = $region32
      $region31: #{discriminator_perceptual_loss.5} parent=23 // pred_region
        %s188 = smul.u32 2, %s18
        %p189 = scmp.lt.s32.totalorder %s17, 1
        %s190 = scalar_select %p189, %s17, 1
        %p191 = scmp.lt.s32.totalorder %s188, 1
        %s192 = scalar_select %p191, %s188, 1
        %s193 = smul.addr %s192, 2
        %s194 = smul.addr %s190, 4
        %s195 = sadd.s32 %s193, %s194
        %s196 = smul.addr %s195, 4
        %s197 = scalar_lea.vmem %s1, %s196
        %s198 = smul.u32 2, %s18
      $region32: #{discriminator_perceptual_loss.5} parent=23 // pred_fallthru
        _
    $region24: #{discriminator_perceptual_loss.5} parent=5 // pred_fallthru
      _
    %p199 = scmp.le.s32.totalorder 1, %s10
    %p200 = scmp.lt.s32.totalorder %s10, 3
    %p201 = pnand %p199, %p200
    %p202 = pneg %p201
    // Predicated region
    $region33: #{discriminator_perceptual_loss.5} parent=5 // pred_check
      _
    $region34: #{discriminator_perceptual_loss.5} parent=5 // pred_check_branch
      %204 = sbr.rel (%p201) target = $region36
    $region35: #{discriminator_perceptual_loss.5} parent=5 // pred_region
      %s205 = ssub.s32 %s10, 1
      %s206 = smul.u32 2, %s20
      %p207 = scmp.lt.s32.totalorder %s19, 1
      %s208 = scalar_select %p207, %s19, 1
      %p209 = scmp.lt.s32.totalorder %s206, 1
      %s210 = scalar_select %p209, %s206, 1
      %s211 = smul.addr %s210, 2
      %s212 = smul.addr %s208, 4
      %s213 = sadd.s32 %s211, %s212
      %s214 = smul.addr %s213, 4
      %s215 = scalar_lea.vmem %s0, %s214
      %p216 = pneg %p50
      %p217 = pneg %p47
      %s218 = smul.u32 2, %s20
      %p219 = scmp.lt.s32.totalorder %s19, 1
      %s220 = scalar_select %p219, %s19, 1
      %p221 = scmp.lt.s32.totalorder %s218, 1
      %s222 = scalar_select %p221, %s218, 1
      %s223 = smul.addr %s222, 2
      %s224 = smul.addr %s220, 4
      %s225 = sadd.s32 %s223, %s224
      %s226 = smul.addr %s225, 4
      %s227 = scalar_lea.vmem %s1, %s226
      %p228 = pneg %p78
      %p229 = pneg %p75
      %p230 = pneg %p99
      %p231 = pneg %p96
      %p232 = pneg %p120
      %p233 = pneg %p117
      %p234 = pneg %p146
      %p235 = pneg %p143
      %p236 = scmp.lt.s32.totalorder %s19, 1
      %s237 = scalar_select %p236, %s19, 1
      %s238 = scalar_lea.vmem %s4, %s237
      %s239 = smul.u32 2, %s20
      %p240 = scmp.lt.s32.totalorder %s19, 1
      %s241 = scalar_select %p240, %s19, 1
      %p242 = scmp.lt.s32.totalorder %s239, 1
      %s243 = scalar_select %p242, %s239, 1
      %s244 = smul.addr %s243, 2
      %s245 = smul.addr %s241, 4
      %s246 = sadd.s32 %s244, %s245
      %s247 = smul.addr %s246, 4
      %s248 = scalar_lea.vmem %s0, %s247
      %s249 = smul.u32 2, %s20
      %s250 = smul.u32 2, %s20
      %p251 = scmp.lt.s32.totalorder %s19, 1
      %s252 = scalar_select %p251, %s19, 1
      %p253 = scmp.lt.s32.totalorder %s250, 1
      %s254 = scalar_select %p253, %s250, 1
      %s255 = smul.addr %s254, 2
      %s256 = smul.addr %s252, 4
      %s257 = sadd.s32 %s255, %s256
      %s258 = smul.addr %s257, 4
      %s259 = scalar_lea.vmem %s1, %s258
      %s260 = smul.u32 2, %s20
      %p261 = scmp.lt.s32.totalorder %s19, 1
      %s262 = scalar_select %p261, %s19, 1
      %s263 = scalar_lea.vmem %s4, %s262
      %p265 = scmp.eq.s32.totalorder %s20, 0
      // Predicated region
      $region37: #{discriminator_perceptual_loss.5} parent=35 // pred_check
        %p266 = pneg %p265
      $region38: #{discriminator_perceptual_loss.5} parent=35 // pred_check_branch
        %268 = sbr.rel (%p266) target = $region40
      $region39: #{discriminator_perceptual_loss.5} parent=35 // pred_region
        %vm269 = vcmask 0
        %270 = vst.msk [vmem:[%s263] sm:$0x1] %vm269, 0.0
      $region40: #{discriminator_perceptual_loss.5} parent=35 // pred_fallthru
        _
      %v271 = vld [vmem:[%s2] sm:$0xf]
      %v272 = vld [vmem:[%s2 + $0x4] sm:$0xf]
      %v273 = vld [vmem:[%s2 + $0x8] sm:$0xf]
      %v274 = vld [vmem:[%s2 + $0xc] sm:$0xf]
      %v275 = vld [vmem:[%s2 + $0x10] sm:$0xf]
      %v276 = vld [vmem:[%s2 + $0x14] sm:$0xf]
      %v277 = vld [vmem:[%s2 + $0x18] sm:$0xf]
      %v278 = vld [vmem:[%s2 + $0x1c] sm:$0xf]
      %v279 = vld [vmem:[%s2 + $0x20] sm:$0xf]
      %v280 = vld [vmem:[%s2 + $0x24] sm:$0xf]
      %v281 = vld [vmem:[%s2 + $0x28] sm:$0xf]
      %v282 = vld [vmem:[%s2 + $0x2c] sm:$0xf]
      %v283 = vld [vmem:[%s2 + $0x30] sm:$0xf]
      %v284 = vld [vmem:[%s2 + $0x34] sm:$0xf]
      %v285 = vld [vmem:[%s2 + $0x38] sm:$0xf]
      %v286 = vld [vmem:[%s2 + $0x3c] sm:$0xf]
      %v287 = vld [vmem:[%s2 + $0x40] sm:$0xf]
      %v288 = vld [vmem:[%s2 + $0x44] sm:$0xf]
      %v289 = vld [vmem:[%s2 + $0x48] sm:$0xf]
      %v290 = vld [vmem:[%s2 + $0x4c] sm:$0xf]
      %v291 = vld [vmem:[%s2 + $0x50] sm:$0xf]
      %v292 = vld [vmem:[%s2 + $0x54] sm:$0xf]
      %v293 = vld [vmem:[%s2 + $0x58] sm:$0xf]
      %v294 = vld [vmem:[%s2 + $0x5c] sm:$0xf]
      %v295 = vld [vmem:[%s2 + $0x60] sm:$0xf]
      %v296 = vld [vmem:[%s2 + $0x64] sm:$0xf]
      %v297 = vld [vmem:[%s2 + $0x68] sm:$0xf]
      %v298 = vld [vmem:[%s2 + $0x6c] sm:$0xf]
      %v299 = vld [vmem:[%s2 + $0x70] sm:$0xf]
      %v300 = vld [vmem:[%s2 + $0x74] sm:$0xf]
      %v301 = vld [vmem:[%s2 + $0x78] sm:$0xf]
      %v302 = vld [vmem:[%s2 + $0x7c] sm:$0xf]
      %v303 = vld [vmem:[%s3] sm:$0x1]
      %v304 = vld [vmem:[%s248] sm:$0xff]
      %v305 = vld [vmem:[%s248 + $0x8] sm:$0xff]
      %v307 = vlaneseq
      %v308 = vshrl.u32 %v307, 7
      %v309 = vsub.s32 0, %v308
      %v310 = vrot.slane %v303, %v309
      %v314 = vunpack.c.l.b16 %v304
      %v315 = vunpack.c.h.b16 %v304
      %v316 = vunpack.c.l.b16 %v305
      %v317 = vunpack.c.h.b16 %v305
      %v318 = vpack.c.b16 %v316, %v314
      %v319 = vpack.c.b16 %v317, %v315
      %v354 = vunpack.c.l.b16 %v271
      %v355 = vunpack.c.l.b16 %v272
      %v356 = vunpack.c.l.b16 %v273
      %v357 = vunpack.c.l.b16 %v274
      %v358 = vunpack.c.l.b16 %v275
      %v359 = vunpack.c.l.b16 %v276
      %v360 = vunpack.c.l.b16 %v277
      %v361 = vunpack.c.l.b16 %v278
      %v362 = vunpack.c.l.b16 %v279
      %v363 = vunpack.c.l.b16 %v280
      %v364 = vunpack.c.l.b16 %v281
      %v365 = vunpack.c.l.b16 %v282
      %v366 = vunpack.c.l.b16 %v283
      %v367 = vunpack.c.l.b16 %v284
      %v368 = vunpack.c.l.b16 %v285
      %v369 = vunpack.c.l.b16 %v286
      %v370 = vunpack.c.l.b16 %v287
      %v371 = vunpack.c.l.b16 %v288
      %v372 = vunpack.c.l.b16 %v289
      %v373 = vunpack.c.l.b16 %v290
      %v374 = vunpack.c.l.b16 %v291
      %v375 = vunpack.c.l.b16 %v292
      %v376 = vunpack.c.l.b16 %v293
      %v377 = vunpack.c.l.b16 %v294
      %v378 = vunpack.c.l.b16 %v295
      %v379 = vunpack.c.l.b16 %v296
      %v380 = vunpack.c.l.b16 %v297
      %v381 = vunpack.c.l.b16 %v298
      %v382 = vunpack.c.l.b16 %v299
      %v383 = vunpack.c.l.b16 %v300
      %v384 = vunpack.c.l.b16 %v301
      %v385 = vunpack.c.l.b16 %v302
      %v386 = vpack.c.b16 %v355, %v354
      %v387 = vpack.c.b16 %v357, %v356
      %v388 = vpack.c.b16 %v359, %v358
      %v389 = vpack.c.b16 %v361, %v360
      %v390 = vpack.c.b16 %v363, %v362
      %v391 = vpack.c.b16 %v365, %v364
      %v392 = vpack.c.b16 %v367, %v366
      %v393 = vpack.c.b16 %v369, %v368
      %v394 = vpack.c.b16 %v371, %v370
      %v395 = vpack.c.b16 %v373, %v372
      %v396 = vpack.c.b16 %v375, %v374
      %v397 = vpack.c.b16 %v377, %v376
      %v398 = vpack.c.b16 %v379, %v378
      %v399 = vpack.c.b16 %v381, %v380
      %v400 = vpack.c.b16 %v383, %v382
      %v401 = vpack.c.b16 %v385, %v384
      %418 = vmatprep.subr.bf16.mxu0 0
      %419 = vmatpush1.bf16.msra.mxu0 %v393
      %420 = vmatprep.subr.bf16.mxu0 0
      %421 = vmatpush1.bf16.msra.mxu0 %v392
      %422 = vmatprep.subr.bf16.mxu0 0
      %423 = vmatpush1.bf16.msra.mxu0 %v391
      %424 = vmatprep.subr.bf16.mxu0 0
      %425 = vmatpush1.bf16.msra.mxu0 %v390
      %426 = vmatprep.subr.bf16.mxu0 0
      %427 = vmatpush1.bf16.msra.mxu0 %v389
      %428 = vmatprep.subr.bf16.mxu0 0
      %429 = vmatpush1.bf16.msra.mxu0 %v388
      %430 = vmatprep.subr.bf16.mxu0 0
      %431 = vmatpush1.bf16.msra.mxu0 %v387
      %432 = vmatprep.subr.bf16.mxu0 0
      %433 = vmatpush1.bf16.msra.mxu0 %v386
      %434 = vmatprep.subr.bf16.mxu0 0
      %435 = vmatpush2.bf16.msra.mxu0 %v401
      %436 = vmatprep.subr.bf16.mxu0 0
      %437 = vmatpush2.bf16.msra.mxu0 %v400
      %438 = vmatprep.subr.bf16.mxu0 0
      %439 = vmatpush2.bf16.msra.mxu0 %v399
      %440 = vmatprep.subr.bf16.mxu0 0
      %441 = vmatpush2.bf16.msra.mxu0 %v398
      %442 = vmatprep.subr.bf16.mxu0 0
      %443 = vmatpush2.bf16.msra.mxu0 %v397
      %444 = vmatprep.subr.bf16.mxu0 0
      %445 = vmatpush2.bf16.msra.mxu0 %v396
      %446 = vmatprep.subr.bf16.mxu0 0
      %447 = vmatpush2.bf16.msra.mxu0 %v395
      %448 = vmatprep.subr.bf16.mxu0 0
      %449 = vmatpush2.bf16.msra.mxu0 %v394
      %450 = vmatprep.mubr.bf16.mxu0 %v319
      %451 = vmatmul.mubr.bf16.gmra.mxu0 %v318
      %v452 = vpop.f32.mrf.mxu0
      %v453 = vadd.f32 %v310, %v452
      %v454 = vpop.f32.mrf.mxu0
      %v455 = vpop.f32.mrf.mxu0
      %v456 = vadd.f32 %v310, %v455
      %v457 = vpop.f32.mrf.mxu0
      %458 = vdwg.mxu0
      %v459 = vld [vmem:[%s259] sm:$0xff]
      %v460 = vld [vmem:[%s259 + $0x8] sm:$0xff]
      %v463 = vunpack.c.l.b16 %v459
      %v464 = vunpack.c.h.b16 %v459
      %v465 = vunpack.c.l.b16 %v460
      %v466 = vunpack.c.h.b16 %v460
      %v467 = vpack.c.b16 %v465, %v463
      %v468 = vpack.c.b16 %v466, %v464
      %471 = vmatprep.subr.bf16.mxu0 0
      %472 = vmatpush1.bf16.msra.mxu0 %v393
      %473 = vmatprep.subr.bf16.mxu0 0
      %474 = vmatpush1.bf16.msra.mxu0 %v392
      %475 = vmatprep.subr.bf16.mxu0 0
      %476 = vmatpush1.bf16.msra.mxu0 %v391
      %477 = vmatprep.subr.bf16.mxu0 0
      %478 = vmatpush1.bf16.msra.mxu0 %v390
      %479 = vmatprep.subr.bf16.mxu0 0
      %480 = vmatpush1.bf16.msra.mxu0 %v389
      %481 = vmatprep.subr.bf16.mxu0 0
      %482 = vmatpush1.bf16.msra.mxu0 %v388
      %483 = vmatprep.subr.bf16.mxu0 0
      %484 = vmatpush1.bf16.msra.mxu0 %v387
      %485 = vmatprep.subr.bf16.mxu0 0
      %486 = vmatpush1.bf16.msra.mxu0 %v386
      %487 = vmatprep.subr.bf16.mxu0 0
      %488 = vmatpush2.bf16.msra.mxu0 %v401
      %489 = vmatprep.subr.bf16.mxu0 0
      %490 = vmatpush2.bf16.msra.mxu0 %v400
      %491 = vmatprep.subr.bf16.mxu0 0
      %492 = vmatpush2.bf16.msra.mxu0 %v399
      %493 = vmatprep.subr.bf16.mxu0 0
      %494 = vmatpush2.bf16.msra.mxu0 %v398
      %495 = vmatprep.subr.bf16.mxu0 0
      %496 = vmatpush2.bf16.msra.mxu0 %v397
      %497 = vmatprep.subr.bf16.mxu0 0
      %498 = vmatpush2.bf16.msra.mxu0 %v396
      %499 = vmatprep.subr.bf16.mxu0 0
      %500 = vmatpush2.bf16.msra.mxu0 %v395
      %501 = vmatprep.subr.bf16.mxu0 0
      %502 = vmatpush2.bf16.msra.mxu0 %v394
      %503 = vmatprep.mubr.bf16.mxu0 %v468
      %504 = vmatmul.mubr.bf16.gmra.mxu0 %v467
      %v505 = vpop.f32.mrf.mxu0
      %v506 = vadd.f32 %v310, %v505
      %v507 = vpop.f32.mrf.mxu0
      %v508 = vpop.f32.mrf.mxu0
      %v509 = vadd.f32 %v310, %v508
      %v510 = vpop.f32.mrf.mxu0
      %511 = vdwg.mxu0
      %v512 = vmul.f32 %v453, 0.2
      %v513 = vmul.f32 %v456, 0.2
      %v514 = vmax.f32 %v453, %v512
      %v515 = vmax.f32 %v456, %v513
      %v516 = vmul.f32 %v506, 0.2
      %v517 = vmul.f32 %v509, 0.2
      %v518 = vmax.f32 %v506, %v516
      %v519 = vmax.f32 %v509, %v517
      %v520 = vsub.f32 %v514, %v518
      %v521 = vsub.f32 %v515, %v519
      %v522 = vmul.f32 %v520, %v520
      %v523 = vmul.f32 %v521, %v521
      %524 = vadd.xlane.f32.xlu0 %v522
      %v525 = vpop.xlane.xlu0 %524
      %526 = vadd.xlane.f32.xlu0 %v523
      %v527 = vpop.xlane.xlu0 %526
      %v528 = vadd.f32 %v525, %v527
      %v529 = vrot.slane %v528, 4
      %v530 = vadd.f32 %v528, %v529
      %v531 = vrot.slane %v530, 2
      %v532 = vadd.f32 %v530, %v531
      %v533 = vrot.slane %v532, 1
      %v534 = vadd.f32 %v532, %v533
      %v535 = vld [vmem:[%s263] sm:$0x1]
      %v536 = vadd.f32 %v535, %v534
      %vm537 = vcmask 0
      %538 = vst.msk [vmem:[%s263] sm:$0x1] %vm537, %v536
      // Predicated region
      $region41: #{discriminator_perceptual_loss.5} parent=35 // pred_check
        %p539 = pneg %p265
      $region42: #{discriminator_perceptual_loss.5} parent=35 // pred_check_branch
        %541 = sbr.rel (%p539) target = $region44
      $region43: #{discriminator_perceptual_loss.5} parent=35 // pred_region
        %v542 = vld [vmem:[%s263] sm:$0x1]
        %v543 = vmul.f32 %v542, 0.0078125
        %544 = vst.msk [vmem:[%s263] sm:$0x1] %vm537, %v543
      $region44: #{discriminator_perceptual_loss.5} parent=35 // pred_fallthru
        _
      %p545 = scmp.lt.s32.totalorder %s19, 1
      %s546 = scalar_select %p545, %s19, 1
      %s547 = scalar_lea.vmem %s4, %s546
      // Predicated region
      $region45: #{discriminator_perceptual_loss.5} parent=35 // pred_check
        %p548 = pneg %p143
      $region46: #{discriminator_perceptual_loss.5} parent=35 // pred_check_branch
        %550 = sbr.rel (%p548) target = $region48
      $region47: #{discriminator_perceptual_loss.5} parent=35 // pred_region
        _
      $region48: #{discriminator_perceptual_loss.5} parent=35 // pred_fallthru
        _
    $region36: #{discriminator_perceptual_loss.5} parent=5 // pred_fallthru
      _
    %p551 = scmp.le.s32.totalorder 2, %s10
    // Predicated region
    $region49: #{discriminator_perceptual_loss.5} parent=5 // pred_check
      %p552 = pneg %p551
    $region50: #{discriminator_perceptual_loss.5} parent=5 // pred_check_branch
      %554 = sbr.rel (%p552) target = $region52
    $region51: #{discriminator_perceptual_loss.5} parent=5 // pred_region
      %s555 = ssub.s32 %s10, 2
      // Predicated region
      $region53: #{discriminator_perceptual_loss.5} parent=51 // pred_check
        %p556 = pneg %p149
      $region54: #{discriminator_perceptual_loss.5} parent=51 // pred_check_branch
        %558 = sbr.rel (%p556) target = $region56
      $region55: #{discriminator_perceptual_loss.5} parent=51 // pred_region
        %p559 = scmp.lt.s32.totalorder %s21, 1
        %s560 = scalar_select %p559, %s21, 1
        %s561 = scalar_lea.vmem %s4, %s560
      $region56: #{discriminator_perceptual_loss.5} parent=51 // pred_fallthru
        _
    $region52: #{discriminator_perceptual_loss.5} parent=5 // pred_fallthru
      _
  $region6: #{discriminator_perceptual_loss.5} parent=0 // loop_footer
    %s14 = sadd.s32 1, %s10
  $region7: #{discriminator_perceptual_loss.5} parent=0 // loop_footer_branch
    %9 = sbr.rel target = $region3
  $region8: #{discriminator_perceptual_loss.5} parent=0 // loop_exit
    _

</llo_original>
